<compile_context>
chip_gen: v7x
topology: tpu7x:2x2x1
jax: 0.10.0
libtpu: 0.0.40
codegen_flags: <defaults>
</compile_context>

<pallas_src>
import jax
import jax.numpy as jnp
from jax import lax
from jax.experimental import pallas as pl
from jax.experimental.pallas import tpu as pltpu

# ---- small-shape config (stand-ins for the global `config`) ----
HIDDEN = 32      # config.lm_hidden (768 in the real model)
C_EMB = 4
N_EMB = 8
A_EMB = 8
SEQ = 8
BATCH = 2
K_NEIGH = 4      # fixed (dense) neighbor count per entity
VOCAB = 64
FEAT = HIDDEN + 2 * C_EMB + N_EMB
FEAT2 = FEAT // 2
LEAKY_SLOPE = 0.01          # nn.LeakyReLU default
INV_SQRT2 = 0.7071067811865476

# ---- packed weight-slab row offsets (all multiples of 8 since H, A are) ----
_R_WNODE = 0                        # (H, A+1)  [w_attn^T | w_attn^T @ attn_node_half]
_R_WNEI = HIDDEN                    # (H, A+1)  [w_attn^T | w_attn^T @ attn_nei_half]
_R_W1P = 2 * HIDDEN                 # (H, FEAT2)   pooled rows of linear1^T
_R_WN1 = 3 * HIDDEN                 # (A, FEAT2)   neigh_linear(sim1) ∘ linear1
_R_WN2 = 3 * HIDDEN + A_EMB         # (A, FEAT2)   neigh_linear(sim2) ∘ linear1
_R_W2 = 3 * HIDDEN + 2 * A_EMB      # (FEAT2, 2)   linear2^T
_R_BAW = _R_W2 + FEAT2              # row 0: w_attn bias              (A,)
_R_WC1 = _R_BAW + 8                 # row 0: coord_linear ∘ linear1   (FEAT2,)
_R_B1 = _R_WC1 + 8                  # row 0: fused linear1 bias       (FEAT2,)
_R_B2 = _R_B1 + 8                   # row 0: linear2 bias             (2,)
_SLAB_ROWS = _R_B2 + 8
_SLAB_COLS = max(FEAT2, A_EMB + 1)


# ---------------- fused Pallas kernel ----------------

def geo_fused_kernel(scal_ref,                 # SMEM (3,): [bat_eff, b_attn_w, b_attn_b]
                     pooled_ref,               # (Bb, H)
                     avg1_ref, avg2_ref,       # (Bb, H)
                     neigh1_ref, neigh2_ref,   # (Bb, K*H)   batch-major, pure reshape
                     cd_ref,                   # (Bb, 1+2K)  [coord | dist1_k | dist2_k]
                     w_ref,                    # (_SLAB_ROWS, _SLAB_COLS) resident slab
                     out_ref):                 # (Bb, 2)
    H, A, F2, K = HIDDEN, A_EMB, FEAT2, K_NEIGH
    bat = scal_ref[0]      # attn bias with both w_attn-bias score terms folded in
    wbw = scal_ref[1]      # b_attn weight (scalar)
    wbb = scal_ref[2]      # b_attn bias   (scalar)

    # Static views into the packed weight slab (fetched once; constant index_map
    # keeps the slab VMEM-resident across grid steps).
    waw_node = w_ref[_R_WNODE:_R_WNODE + H, 0:A + 1]
    waw_nei = w_ref[_R_WNEI:_R_WNEI + H, 0:A + 1]
    w1p = w_ref[_R_W1P:_R_W1P + H, 0:F2]
    wn1 = w_ref[_R_WN1:_R_WN1 + A, 0:F2]
    wn2 = w_ref[_R_WN2:_R_WN2 + A, 0:F2]
    w2t = w_ref[_R_W2:_R_W2 + F2, 0:2]
    baw = w_ref[_R_BAW:_R_BAW + 1, 0:A]
    wc1 = w_ref[_R_WC1:_R_WC1 + 1, 0:F2]
    b1 = w_ref[_R_B1:_R_B1 + 1, 0:F2]
    b2 = w_ref[_R_B2:_R_B2 + 1, 0:2]

    cd = cd_ref[...]                                                   # (Bb, 1+2K)
    coord = cd[:, 0:1]

    def branch(avg_ref, neigh_ref, dist):
        # ONE augmented dot gives the node feature AND its score contribution.
        pn = jnp.dot(avg_ref[...], waw_node,
                     preferred_element_type=jnp.float32)               # (Bb, A+1)
        w_node = pn[:, :A] + baw
        s_node = pn[:, A:A + 1]
        s_list, wn_list = [], []
        for k in range(K):                  # K tiny & static -> unrolled
            pk = jnp.dot(neigh_ref[:, k * H:(k + 1) * H], waw_nei,
                         preferred_element_type=jnp.float32)           # (Bb, A+1)
            wn_list.append(pk[:, :A] + baw)
            sk = s_node + pk[:, A:A + 1] + bat
            sk = jnp.where(sk >= 0.0, sk, LEAKY_SLOPE * sk)            # LeakyReLU
            s_list.append(sk + dist[:, k:k + 1] * wbw + wbb)           # + b_attn(dist)
        # softmax over the K neighbors (per row), all elementwise.
        m = s_list[0]
        for k in range(1, K):
            m = jnp.maximum(m, s_list[k])
        e_list = [jnp.exp(s - m) for s in s_list]
        denom = e_list[0]
        for k in range(1, K):
            denom = denom + e_list[k]
        inv = pl.reciprocal(denom, approx=True)                        # EUP slot
        ctx = (e_list[0] * inv) * wn_list[0]
        for k in range(1, K):
            ctx = ctx + (e_list[k] * inv) * wn_list[k]                 # (Bb, A)
        return jnp.maximum(ctx * w_node, 0.0)                          # relu(sim)

    sim1 = branch(avg1_ref, neigh1_ref, cd[:, 1:1 + K])
    sim2 = branch(avg2_ref, neigh2_ref, cd[:, 1 + K:1 + 2 * K])

    # linear1 with neigh_linear / coord_linear pre-folded (see prepare_kernel_params)
    h = (jnp.dot(pooled_ref[...], w1p, preferred_element_type=jnp.float32) +
         jnp.dot(sim1, wn1, preferred_element_type=jnp.float32) +
         jnp.dot(sim2, wn2, preferred_element_type=jnp.float32) +
         coord * wc1 + b1)                                             # (Bb, F2)
    h = 0.5 * h * (1.0 + lax.erf(h * INV_SQRT2))                       # exact GELU
    # TODO(synk): nn.Dropout treated as identity (eval-mode / p=0 determinism).

    logits = jnp.dot(h, w2t, preferred_element_type=jnp.float32) + b2  # (Bb, 2)
    mmax = jnp.max(logits, axis=1, keepdims=True)
    lse = mmax + jnp.log(jnp.sum(jnp.exp(logits - mmax), axis=1, keepdims=True))
    out_ref[...] = logits - lse                                        # log_softmax


# ---------------- wrapper ----------------

def fused_forward_pallas(pooled, avg1, avg2, neigh1, neigh2, cd, kp):
    B, H = pooled.shape
    KH = neigh1.shape[1]
    CDW = cd.shape[1]
    # batch block: 8 rows (sublane-aligned) when divisible, else the whole batch.
    Bb = 8 if (B > 8 and B % 8 == 0) else B
    grid = (B // Bb,)
    row = lambda i: (i, 0)
    const = lambda i: (0, 0)
    in_specs = [
        pl.BlockSpec(memory_space=pltpu.MemorySpace.SMEM),        # fused scalars
        pl.BlockSpec((Bb, H), row),                               # pooled
        pl.BlockSpec((Bb, H), row),                               # avg_node1
        pl.BlockSpec((Bb, H), row),                               # avg_node2
        pl.BlockSpec((Bb, KH), row),                              # neigh1 (B, K*H)
        pl.BlockSpec((Bb, KH), row),                              # neigh2 (B, K*H)
        pl.BlockSpec((Bb, CDW), row),                             # coord + dists
        pl.BlockSpec((_SLAB_ROWS, _SLAB_COLS), const),            # resident weights
    ]
    return pl.pallas_call(
        geo_fused_kernel,
        out_shape=jax.ShapeDtypeStruct((B, 2), jnp.float32),
        grid=grid,
        in_specs=in_specs,
        out_specs=pl.BlockSpec((Bb, 2), row),
        compiler_params=pltpu.CompilerParams(
            dimension_semantics=("parallel",)),    # batch blocks shard across TCs (v7x)
    )(kp['scal'], pooled, avg1, avg2, neigh1, neigh2, cd, kp['wslab'])


def geo_ump_er_forward(params, x_tokens, att_mask, x_coord, xn):
    """Forward pass of GeoUmpER (use_geoer=True, use_ump=False, eval dropout)."""
    kp = params['kernel']
    # TODO(synk): BertModel LM replaced by a deterministic embedding lookup.
    # use_ump == False -> pooled_output = output[:, 0, :], so only the CLS row
    # is gathered (no (B,S,H) materialization).
    pooled = params['lm_emb'][x_tokens[:, 0]] * att_mask[:, 0, None]    # (B, H)
    B = pooled.shape[0]
    K = xn['neigh1'].shape[1]
    # Batch-major activations, pure reshapes only (no host-side transpose pass).
    neigh1 = xn['neigh1'].reshape(B, K * HIDDEN)                        # (B, K*H)
    neigh2 = xn['neigh2'].reshape(B, K * HIDDEN)
    # coord + both distance lists lane-packed -> no (*,1) tile-padded operands.
    cd = jnp.concatenate([x_coord.reshape(-1, 1),
                          xn['dist1'][..., 0], xn['dist2'][..., 0]], axis=1)
    return fused_forward_pallas(pooled, xn['avg_node1'], xn['avg_node2'],
                                neigh1, neigh2, cd, kp)


# ---------------- deterministic parameter init ----------------

def _linear(key, out_f, in_f):
    kw, kb = jax.random.split(key)
    bound = 1.0 / (in_f ** 0.5)
    w = jax.random.uniform(kw, (out_f, in_f), jnp.float32, -bound, bound)
    b = jax.random.uniform(kb, (out_f,), jnp.float32, -bound, bound)
    return w, b


def prepare_kernel_params(p):
    """Pre-compose & pack all constant weights ONCE (never per forward call)."""
    A, H, F2, C2 = A_EMB, HIDDEN, FEAT2, 2 * C_EMB
    f32 = jnp.float32
    waw_t = p['w_attn_w'].T.astype(f32)                         # (H, A)
    baw = p['w_attn_b'].reshape(1, A).astype(f32)
    attn_t = p['attn_w'].T.astype(f32)                          # (2A, 1)
    wat_node, wat_nei = attn_t[:A], attn_t[A:]
    # attention-score projection folded into the w_attn matmul (extra column)
    waw_node = jnp.concatenate([waw_t, waw_t @ wat_node], axis=1)       # (H, A+1)
    waw_nei = jnp.concatenate([waw_t, waw_t @ wat_nei], axis=1)         # (H, A+1)
    bat = p['attn_b'][0] + (baw @ wat_node)[0, 0] + (baw @ wat_nei)[0, 0]

    w1_t = p['lin1_w'].T.astype(f32)                            # (FEAT, F2)
    w1p, w1c, w1n = w1_t[:H], w1_t[H:H + C2], w1_t[H + C2:]
    wn_t = p['neigh_w'].T.astype(f32)                           # (2A, N_EMB)
    wn1 = wn_t[:A] @ w1n                                        # (A, F2)
    wn2 = wn_t[A:] @ w1n                                        # (A, F2)
    wc1 = p['coord_w'].reshape(1, C2).astype(f32) @ w1c         # (1, F2)
    b1 = (p['lin1_b'].reshape(1, F2).astype(f32) +
          p['neigh_b'].reshape(1, -1).astype(f32) @ w1n +
          p['coord_b'].reshape(1, -1).astype(f32) @ w1c)        # (1, F2)
    w2_t = p['lin2_w'].T.astype(f32)                            # (F2, 2)
    b2 = p['lin2_b'].reshape(1, 2).astype(f32)

    def block(m, rows):
        m = jnp.asarray(m, f32)
        out = jnp.zeros((rows, _SLAB_COLS), f32)
        return out.at[:m.shape[0], :m.shape[1]].set(m)

    wslab = jnp.concatenate([
        block(waw_node, H), block(waw_nei, H), block(w1p, H),
        block(wn1, A), block(wn2, A), block(w2_t, F2),
        block(baw, 8), block(wc1, 8), block(b1, 8), block(b2, 8)], axis=0)
    assert wslab.shape == (_SLAB_ROWS, _SLAB_COLS)
    scal = jnp.stack([bat, p['b_attn_w'][0, 0], p['b_attn_b'][0]]).astype(f32)
    return {'scal': scal, 'wslab': wslab}


def init_params(key):
    ks = jax.random.split(key, 9)
    p = {}
    p['lm_emb'] = 0.02 * jax.random.normal(ks[0], (VOCAB, HIDDEN), jnp.float32)
    p['neigh_emb'] = 0.02 * jax.random.normal(ks[1], (VOCAB, HIDDEN), jnp.float32)
    p['w_attn_w'], p['w_attn_b'] = _linear(ks[2], A_EMB, HIDDEN)       # w_attn
    p['attn_w'], p['attn_b'] = _linear(ks[3], 1, 2 * A_EMB)            # attn
    p['b_attn_w'], p['b_attn_b'] = _linear(ks[4], 1, 1)                # b_attn
    p['neigh_w'], p['neigh_b'] = _linear(ks[5], N_EMB, 2 * A_EMB)      # neigh_linear
    p['coord_w'], p['coord_b'] = _linear(ks[6], 2 * C_EMB, 1)          # coord_linear
    p['lin1_w'], p['lin1_b'] = _linear(ks[7], FEAT2, FEAT)             # linear1
    p['lin2_w'], p['lin2_b'] = _linear(ks[8], 2, FEAT2)                # linear2
    p['kernel'] = prepare_kernel_params(p)
    return p


# ---------------- pure-JAX reference (mirrors the PyTorch math) ----------------

def reference_forward(p, x_tokens, att_mask, x_coord, xn):
    output = p['lm_emb'][x_tokens] * att_mask[..., None]
    pooled = output[:, 0, :]

    def branch(avg, neigh, dist):
        w_node = avg @ p['w_attn_w'].T + p['w_attn_b']                  # (B, A)
        w_nei = neigh @ p['w_attn_w'].T + p['w_attn_b']                 # (B, K, A)
        xcat = jnp.concatenate(
            [jnp.broadcast_to(w_node[:, None, :], w_nei.shape), w_nei], axis=-1)
        s = xcat @ p['attn_w'].T + p['attn_b']                          # (B, K, 1)
        s = jnp.where(s >= 0.0, s, LEAKY_SLOPE * s)
        s = s + dist @ p['b_attn_w'].T + p['b_attn_b']
        att = jax.nn.softmax(s, axis=1)
        ctx = jnp.sum(w_nei * att, axis=1)
        return ctx * w_node

    sim1 = branch(xn['avg_node1'], xn['neigh1'], xn['dist1'])
    sim2 = branch(xn['avg_node2'], xn['neigh2'], xn['dist2'])
    xnr = jnp.maximum(jnp.concatenate([sim1, sim2], axis=1), 0.0)
    xnr = xnr @ p['neigh_w'].T + p['neigh_b']
    xc = x_coord.reshape(-1, 1) @ p['coord_w'].T + p['coord_b']
    feat = jnp.concatenate([pooled, xc, xnr], axis=1)
    h = feat @ p['lin1_w'].T + p['lin1_b']
    h = 0.5 * h * (1.0 + lax.erf(h * INV_SQRT2))
    logits = h @ p['lin2_w'].T + p['lin2_b']
    return jax.nn.log_softmax(logits, axis=1)


if __name__ == "__main__":
    key = jax.random.PRNGKey(0)
    (kp_, kx, kc, kn1, kn2, kname1, kname2, kd1, kd2) = jax.random.split(key, 9)
    params = init_params(kp_)

    x_tokens = jax.random.randint(kx, (BATCH, SEQ), 0, VOCAB)
    att_mask = jnp.ones((BATCH, SEQ), jnp.float32)
    x_coord = jax.random.uniform(kc, (BATCH,), jnp.float32, 0.0, 1.0)

    # Synthetic "neighbert" outputs (token mean-pooled embeddings), mirroring
    # encode_neighbor's frozen-BERT pooling.
    def neighbert_mean(tok):
        return jnp.mean(params['neigh_emb'][tok], axis=-2)

    name1_tok = jax.random.randint(kname1, (BATCH, SEQ), 0, VOCAB)
    name2_tok = jax.random.randint(kname2, (BATCH, SEQ), 0, VOCAB)
    neigh1_tok = jax.random.randint(kn1, (BATCH, K_NEIGH, SEQ), 0, VOCAB)
    neigh2_tok = jax.random.randint(kn2, (BATCH, K_NEIGH, SEQ), 0, VOCAB)
    xn = {
        'avg_node1': neighbert_mean(name1_tok),                                   # (B, H)
        'avg_node2': neighbert_mean(name2_tok),                                   # (B, H)
        'neigh1': neighbert_mean(neigh1_tok),                                     # (B, K, H)
        'neigh2': neighbert_mean(neigh2_tok),                                     # (B, K, H)
        'dist1': jax.random.uniform(kd1, (BATCH, K_NEIGH, 1), jnp.float32, 0.0, 10.0),
        'dist2': jax.random.uniform(kd2, (BATCH, K_NEIGH, 1), jnp.float32, 0.0, 10.0),
    }

    out = geo_ump_er_forward(params, x_tokens, att_mask, x_coord, xn)
    out = jax.block_until_ready(out)
    ref = jax.block_until_ready(reference_forward(params, x_tokens, att_mask, x_coord, xn))

    assert out.shape == (BATCH, 2)
    assert bool(jnp.all(jnp.isfinite(out)))
    # log_softmax rows must exponentiate-sum to 1 (exact property of the output)
    assert bool(jnp.allclose(jnp.sum(jnp.exp(out), axis=1), 1.0, atol=1e-5))
    # fused pre-composed kernel must match the straightforward concat-based math
    # (2e-3 tolerance: softmax uses the EUP approximate reciprocal).
    assert bool(jnp.allclose(out, ref, atol=2e-3, rtol=2e-3))
    print("KERNEL_OK")
</pallas_src>

<mosaic_0001>
module attributes {stable_mosaic.version = 11 : i64} {
  func.func @geo_fused_kernel(%arg0: i32, %arg1: memref<3xf32, #tpu.memory_space<smem>>, %arg2: memref<2x32xf32, #tpu.memory_space<vmem>>, %arg3: memref<2x32xf32, #tpu.memory_space<vmem>>, %arg4: memref<2x32xf32, #tpu.memory_space<vmem>>, %arg5: memref<2x128xf32, #tpu.memory_space<vmem>>, %arg6: memref<2x128xf32, #tpu.memory_space<vmem>>, %arg7: memref<2x9xf32, #tpu.memory_space<vmem>>, %arg8: memref<168x24xf32, #tpu.memory_space<vmem>>, %arg9: memref<2x2xf32, #tpu.memory_space<vmem>>) attributes {dimension_semantics = [#tpu.dimension_semantics<parallel>], iteration_bounds = array<i64: 1>, scalar_prefetch = 0 : i64, scratch_operands = 0 : i64, tpu.core_type = #tpu.core_type<tc>, window_params = [{transform_indices = @transform_0, window_bounds = array<i64: 3>}, {transform_indices = @transform_1, window_bounds = array<i64: 2, 32>}, {transform_indices = @transform_2, window_bounds = array<i64: 2, 32>}, {transform_indices = @transform_3, window_bounds = array<i64: 2, 32>}, {transform_indices = @transform_4, window_bounds = array<i64: 2, 128>}, {transform_indices = @transform_5, window_bounds = array<i64: 2, 128>}, {transform_indices = @transform_6, window_bounds = array<i64: 2, 9>}, {pipeline_mode = #tpu.pipeline_mode<synchronous>, transform_indices = @transform_7, window_bounds = array<i64: 168, 24>}, {transform_indices = @transform_8, window_bounds = array<i64: 2, 2>}]} {
    %c0 = arith.constant 0 : index
    %0 = memref.load %arg1[%c0] : memref<3xf32, #tpu.memory_space<smem>>
    %c1 = arith.constant 1 : index
    %1 = memref.load %arg1[%c1] : memref<3xf32, #tpu.memory_space<smem>>
    %c2 = arith.constant 2 : index
    %2 = memref.load %arg1[%c2] : memref<3xf32, #tpu.memory_space<smem>>
    %c0_0 = arith.constant 0 : index
    %c0_1 = arith.constant 0 : index
    %3 = vector.load %arg8[%c0_0, %c0_1] : memref<168x24xf32, #tpu.memory_space<vmem>>, vector<32x9xf32>
    %c32 = arith.constant 32 : index
    %c0_2 = arith.constant 0 : index
    %4 = vector.load %arg8[%c32, %c0_2] : memref<168x24xf32, #tpu.memory_space<vmem>>, vector<32x9xf32>
    %c64 = arith.constant 64 : index
    %c0_3 = arith.constant 0 : index
    %5 = vector.load %arg8[%c64, %c0_3] : memref<168x24xf32, #tpu.memory_space<vmem>>, vector<32x24xf32>
    %c96 = arith.constant 96 : index
    %c0_4 = arith.constant 0 : index
    %6 = vector.load %arg8[%c96, %c0_4] : memref<168x24xf32, #tpu.memory_space<vmem>>, vector<8x24xf32>
    %c104 = arith.constant 104 : index
    %c0_5 = arith.constant 0 : index
    %7 = vector.load %arg8[%c104, %c0_5] : memref<168x24xf32, #tpu.memory_space<vmem>>, vector<8x24xf32>
    %c112 = arith.constant 112 : index
    %c0_6 = arith.constant 0 : index
    %8 = vector.load %arg8[%c112, %c0_6] : memref<168x24xf32, #tpu.memory_space<vmem>>, vector<24x2xf32>
    %c136 = arith.constant 136 : index
    %c0_7 = arith.constant 0 : index
    %9 = vector.load %arg8[%c136, %c0_7] : memref<168x24xf32, #tpu.memory_space<vmem>>, vector<1x8xf32>
    %c144 = arith.constant 144 : index
    %c0_8 = arith.constant 0 : index
    %10 = vector.load %arg8[%c144, %c0_8] : memref<168x24xf32, #tpu.memory_space<vmem>>, vector<1x24xf32>
    %c152 = arith.constant 152 : index
    %c0_9 = arith.constant 0 : index
    %11 = vector.load %arg8[%c152, %c0_9] : memref<168x24xf32, #tpu.memory_space<vmem>>, vector<1x24xf32>
    %c160 = arith.constant 160 : index
    %c0_10 = arith.constant 0 : index
    %12 = vector.load %arg8[%c160, %c0_10] : memref<168x24xf32, #tpu.memory_space<vmem>>, vector<1x2xf32>
    %c0_11 = arith.constant 0 : index
    %c0_12 = arith.constant 0 : index
    %13 = vector.load %arg7[%c0_11, %c0_12] : memref<2x9xf32, #tpu.memory_space<vmem>>, vector<2x9xf32>
    %14 = vector.extract_strided_slice %13 {offsets = [0, 0], sizes = [2, 1], strides = [1, 1]} : vector<2x9xf32> to vector<2x1xf32>
    %15 = vector.extract_strided_slice %13 {offsets = [0, 1], sizes = [2, 4], strides = [1, 1]} : vector<2x9xf32> to vector<2x4xf32>
    %c0_13 = arith.constant 0 : index
    %c0_14 = arith.constant 0 : index
    %16 = vector.load %arg3[%c0_13, %c0_14] : memref<2x32xf32, #tpu.memory_space<vmem>>, vector<2x32xf32>
    %cst = arith.constant dense<0.000000e+00> : vector<2x9xf32>
    %17 = tpu.matmul %16, %3, %cst {dimension_numbers = #tpu.dot_dimension_numbers<[1], [0], [0], [1], [0, 0, 1, 1], [], []>} : vector<2x32xf32>, vector<32x9xf32>, vector<2x9xf32> -> vector<2x9xf32>
    %18 = vector.extract_strided_slice %17 {offsets = [0, 0], sizes = [2, 8], strides = [1, 1]} : vector<2x9xf32> to vector<2x8xf32>
    %19 = vector.broadcast %9 : vector<1x8xf32> to vector<2x8xf32>
    %20 = arith.addf %18, %19 : vector<2x8xf32>
    %21 = vector.extract_strided_slice %17 {offsets = [0, 8], sizes = [2, 1], strides = [1, 1]} : vector<2x9xf32> to vector<2x1xf32>
    %c0_15 = arith.constant 0 : index
    %c0_16 = arith.constant 0 : index
    %22 = vector.load %arg5[%c0_15, %c0_16] : memref<2x128xf32, #tpu.memory_space<vmem>>, vector<2x32xf32>
    %cst_17 = arith.constant dense<0.000000e+00> : vector<2x9xf32>
    %23 = tpu.matmul %22, %4, %cst_17 {dimension_numbers = #tpu.dot_dimension_numbers<[1], [0], [0], [1], [0, 0, 1, 1], [], []>} : vector<2x32xf32>, vector<32x9xf32>, vector<2x9xf32> -> vector<2x9xf32>
    %24 = vector.extract_strided_slice %23 {offsets = [0, 0], sizes = [2, 8], strides = [1, 1]} : vector<2x9xf32> to vector<2x8xf32>
    %25 = vector.broadcast %9 : vector<1x8xf32> to vector<2x8xf32>
    %26 = arith.addf %24, %25 : vector<2x8xf32>
    %27 = vector.extract_strided_slice %23 {offsets = [0, 8], sizes = [2, 1], strides = [1, 1]} : vector<2x9xf32> to vector<2x1xf32>
    %28 = arith.addf %21, %27 : vector<2x1xf32>
    %29 = vector.broadcast %0 : f32 to vector<2x1xf32>
    %30 = arith.addf %28, %29 : vector<2x1xf32>
    %cst_18 = arith.constant 0.000000e+00 : f32
    %31 = vector.broadcast %cst_18 : f32 to vector<2x1xf32>
    %32 = arith.cmpf oge, %30, %31 : vector<2x1xf32>
    %cst_19 = arith.constant 0.00999999977 : f32
    %33 = vector.broadcast %cst_19 : f32 to vector<2x1xf32>
    %34 = arith.mulf %33, %30 : vector<2x1xf32>
    %35 = arith.select %32, %30, %34 : vector<2x1xi1>, vector<2x1xf32>
    %36 = vector.extract_strided_slice %15 {offsets = [0, 0], sizes = [2, 1], strides = [1, 1]} : vector<2x4xf32> to vector<2x1xf32>
    %37 = vector.broadcast %1 : f32 to vector<2x1xf32>
    %38 = arith.mulf %36, %37 : vector<2x1xf32>
    %39 = arith.addf %35, %38 : vector<2x1xf32>
    %40 = vector.broadcast %2 : f32 to vector<2x1xf32>
    %41 = arith.addf %39, %40 : vector<2x1xf32>
    %c0_20 = arith.constant 0 : index
    %c32_21 = arith.constant 32 : index
    %42 = vector.load %arg5[%c0_20, %c32_21] : memref<2x128xf32, #tpu.memory_space<vmem>>, vector<2x32xf32>
    %cst_22 = arith.constant dense<0.000000e+00> : vector<2x9xf32>
    %43 = tpu.matmul %42, %4, %cst_22 {dimension_numbers = #tpu.dot_dimension_numbers<[1], [0], [0], [1], [0, 0, 1, 1], [], []>} : vector<2x32xf32>, vector<32x9xf32>, vector<2x9xf32> -> vector<2x9xf32>
    %44 = vector.extract_strided_slice %43 {offsets = [0, 0], sizes = [2, 8], strides = [1, 1]} : vector<2x9xf32> to vector<2x8xf32>
    %45 = vector.broadcast %9 : vector<1x8xf32> to vector<2x8xf32>
    %46 = arith.addf %44, %45 : vector<2x8xf32>
    %47 = vector.extract_strided_slice %43 {offsets = [0, 8], sizes = [2, 1], strides = [1, 1]} : vector<2x9xf32> to vector<2x1xf32>
    %48 = arith.addf %21, %47 : vector<2x1xf32>
    %49 = vector.broadcast %0 : f32 to vector<2x1xf32>
    %50 = arith.addf %48, %49 : vector<2x1xf32>
    %cst_23 = arith.constant 0.000000e+00 : f32
    %51 = vector.broadcast %cst_23 : f32 to vector<2x1xf32>
    %52 = arith.cmpf oge, %50, %51 : vector<2x1xf32>
    %cst_24 = arith.constant 0.00999999977 : f32
    %53 = vector.broadcast %cst_24 : f32 to vector<2x1xf32>
    %54 = arith.mulf %53, %50 : vector<2x1xf32>
    %55 = arith.select %52, %50, %54 : vector<2x1xi1>, vector<2x1xf32>
    %56 = vector.extract_strided_slice %15 {offsets = [0, 1], sizes = [2, 1], strides = [1, 1]} : vector<2x4xf32> to vector<2x1xf32>
    %57 = vector.broadcast %1 : f32 to vector<2x1xf32>
    %58 = arith.mulf %56, %57 : vector<2x1xf32>
    %59 = arith.addf %55, %58 : vector<2x1xf32>
    %60 = vector.broadcast %2 : f32 to vector<2x1xf32>
    %61 = arith.addf %59, %60 : vector<2x1xf32>
    %c0_25 = arith.constant 0 : index
    %c64_26 = arith.constant 64 : index
    %62 = vector.load %arg5[%c0_25, %c64_26] : memref<2x128xf32, #tpu.memory_space<vmem>>, vector<2x32xf32>
    %cst_27 = arith.constant dense<0.000000e+00> : vector<2x9xf32>
    %63 = tpu.matmul %62, %4, %cst_27 {dimension_numbers = #tpu.dot_dimension_numbers<[1], [0], [0], [1], [0, 0, 1, 1], [], []>} : vector<2x32xf32>, vector<32x9xf32>, vector<2x9xf32> -> vector<2x9xf32>
    %64 = vector.extract_strided_slice %63 {offsets = [0, 0], sizes = [2, 8], strides = [1, 1]} : vector<2x9xf32> to vector<2x8xf32>
    %65 = vector.broadcast %9 : vector<1x8xf32> to vector<2x8xf32>
    %66 = arith.addf %64, %65 : vector<2x8xf32>
    %67 = vector.extract_strided_slice %63 {offsets = [0, 8], sizes = [2, 1], strides = [1, 1]} : vector<2x9xf32> to vector<2x1xf32>
    %68 = arith.addf %21, %67 : vector<2x1xf32>
    %69 = vector.broadcast %0 : f32 to vector<2x1xf32>
    %70 = arith.addf %68, %69 : vector<2x1xf32>
    %cst_28 = arith.constant 0.000000e+00 : f32
    %71 = vector.broadcast %cst_28 : f32 to vector<2x1xf32>
    %72 = arith.cmpf oge, %70, %71 : vector<2x1xf32>
    %cst_29 = arith.constant 0.00999999977 : f32
    %73 = vector.broadcast %cst_29 : f32 to vector<2x1xf32>
    %74 = arith.mulf %73, %70 : vector<2x1xf32>
    %75 = arith.select %72, %70, %74 : vector<2x1xi1>, vector<2x1xf32>
    %76 = vector.extract_strided_slice %15 {offsets = [0, 2], sizes = [2, 1], strides = [1, 1]} : vector<2x4xf32> to vector<2x1xf32>
    %77 = vector.broadcast %1 : f32 to vector<2x1xf32>
    %78 = arith.mulf %76, %77 : vector<2x1xf32>
    %79 = arith.addf %75, %78 : vector<2x1xf32>
    %80 = vector.broadcast %2 : f32 to vector<2x1xf32>
    %81 = arith.addf %79, %80 : vector<2x1xf32>
    %c0_30 = arith.constant 0 : index
    %c96_31 = arith.constant 96 : index
    %82 = vector.load %arg5[%c0_30, %c96_31] : memref<2x128xf32, #tpu.memory_space<vmem>>, vector<2x32xf32>
    %cst_32 = arith.constant dense<0.000000e+00> : vector<2x9xf32>
    %83 = tpu.matmul %82, %4, %cst_32 {dimension_numbers = #tpu.dot_dimension_numbers<[1], [0], [0], [1], [0, 0, 1, 1], [], []>} : vector<2x32xf32>, vector<32x9xf32>, vector<2x9xf32> -> vector<2x9xf32>
    %84 = vector.extract_strided_slice %83 {offsets = [0, 0], sizes = [2, 8], strides = [1, 1]} : vector<2x9xf32> to vector<2x8xf32>
    %85 = vector.broadcast %9 : vector<1x8xf32> to vector<2x8xf32>
    %86 = arith.addf %84, %85 : vector<2x8xf32>
    %87 = vector.extract_strided_slice %83 {offsets = [0, 8], sizes = [2, 1], strides = [1, 1]} : vector<2x9xf32> to vector<2x1xf32>
    %88 = arith.addf %21, %87 : vector<2x1xf32>
    %89 = vector.broadcast %0 : f32 to vector<2x1xf32>
    %90 = arith.addf %88, %89 : vector<2x1xf32>
    %cst_33 = arith.constant 0.000000e+00 : f32
    %91 = vector.broadcast %cst_33 : f32 to vector<2x1xf32>
    %92 = arith.cmpf oge, %90, %91 : vector<2x1xf32>
    %cst_34 = arith.constant 0.00999999977 : f32
    %93 = vector.broadcast %cst_34 : f32 to vector<2x1xf32>
    %94 = arith.mulf %93, %90 : vector<2x1xf32>
    %95 = arith.select %92, %90, %94 : vector<2x1xi1>, vector<2x1xf32>
    %96 = vector.extract_strided_slice %15 {offsets = [0, 3], sizes = [2, 1], strides = [1, 1]} : vector<2x4xf32> to vector<2x1xf32>
    %97 = vector.broadcast %1 : f32 to vector<2x1xf32>
    %98 = arith.mulf %96, %97 : vector<2x1xf32>
    %99 = arith.addf %95, %98 : vector<2x1xf32>
    %100 = vector.broadcast %2 : f32 to vector<2x1xf32>
    %101 = arith.addf %99, %100 : vector<2x1xf32>
    %102 = arith.maximumf %41, %61 : vector<2x1xf32>
    %103 = arith.maximumf %102, %81 : vector<2x1xf32>
    %104 = arith.maximumf %103, %101 : vector<2x1xf32>
    %105 = arith.subf %41, %104 : vector<2x1xf32>
    %106 = math.exp %105 : vector<2x1xf32>
    %107 = arith.subf %61, %104 : vector<2x1xf32>
    %108 = math.exp %107 : vector<2x1xf32>
    %109 = arith.subf %81, %104 : vector<2x1xf32>
    %110 = math.exp %109 : vector<2x1xf32>
    %111 = arith.subf %101, %104 : vector<2x1xf32>
    %112 = math.exp %111 : vector<2x1xf32>
    %113 = arith.addf %106, %108 : vector<2x1xf32>
    %114 = arith.addf %113, %110 : vector<2x1xf32>
    %115 = arith.addf %114, %112 : vector<2x1xf32>
    %116 = tpu.reciprocal %115 {approx = true} : vector<2x1xf32> -> vector<2x1xf32>
    %117 = arith.mulf %106, %116 : vector<2x1xf32>
    %118 = vector.broadcast %117 : vector<2x1xf32> to vector<2x8xf32>
    %119 = arith.mulf %118, %26 : vector<2x8xf32>
    %120 = arith.mulf %108, %116 : vector<2x1xf32>
    %121 = vector.broadcast %120 : vector<2x1xf32> to vector<2x8xf32>
    %122 = arith.mulf %121, %46 : vector<2x8xf32>
    %123 = arith.addf %119, %122 : vector<2x8xf32>
    %124 = arith.mulf %110, %116 : vector<2x1xf32>
    %125 = vector.broadcast %124 : vector<2x1xf32> to vector<2x8xf32>
    %126 = arith.mulf %125, %66 : vector<2x8xf32>
    %127 = arith.addf %123, %126 : vector<2x8xf32>
    %128 = arith.mulf %112, %116 : vector<2x1xf32>
    %129 = vector.broadcast %128 : vector<2x1xf32> to vector<2x8xf32>
    %130 = arith.mulf %129, %86 : vector<2x8xf32>
    %131 = arith.addf %127, %130 : vector<2x8xf32>
    %132 = arith.mulf %131, %20 : vector<2x8xf32>
    %cst_35 = arith.constant 0.000000e+00 : f32
    %133 = vector.broadcast %cst_35 : f32 to vector<2x8xf32>
    %134 = arith.maximumf %132, %133 : vector<2x8xf32>
    %135 = vector.extract_strided_slice %13 {offsets = [0, 5], sizes = [2, 4], strides = [1, 1]} : vector<2x9xf32> to vector<2x4xf32>
    %c0_36 = arith.constant 0 : index
    %c0_37 = arith.constant 0 : index
    %136 = vector.load %arg4[%c0_36, %c0_37] : memref<2x32xf32, #tpu.memory_space<vmem>>, vector<2x32xf32>
    %cst_38 = arith.constant dense<0.000000e+00> : vector<2x9xf32>
    %137 = tpu.matmul %136, %3, %cst_38 {dimension_numbers = #tpu.dot_dimension_numbers<[1], [0], [0], [1], [0, 0, 1, 1], [], []>} : vector<2x32xf32>, vector<32x9xf32>, vector<2x9xf32> -> vector<2x9xf32>
    %138 = vector.extract_strided_slice %137 {offsets = [0, 0], sizes = [2, 8], strides = [1, 1]} : vector<2x9xf32> to vector<2x8xf32>
    %139 = vector.broadcast %9 : vector<1x8xf32> to vector<2x8xf32>
    %140 = arith.addf %138, %139 : vector<2x8xf32>
    %141 = vector.extract_strided_slice %137 {offsets = [0, 8], sizes = [2, 1], strides = [1, 1]} : vector<2x9xf32> to vector<2x1xf32>
    %c0_39 = arith.constant 0 : index
    %c0_40 = arith.constant 0 : index
    %142 = vector.load %arg6[%c0_39, %c0_40] : memref<2x128xf32, #tpu.memory_space<vmem>>, vector<2x32xf32>
    %cst_41 = arith.constant dense<0.000000e+00> : vector<2x9xf32>
    %143 = tpu.matmul %142, %4, %cst_41 {dimension_numbers = #tpu.dot_dimension_numbers<[1], [0], [0], [1], [0, 0, 1, 1], [], []>} : vector<2x32xf32>, vector<32x9xf32>, vector<2x9xf32> -> vector<2x9xf32>
    %144 = vector.extract_strided_slice %143 {offsets = [0, 0], sizes = [2, 8], strides = [1, 1]} : vector<2x9xf32> to vector<2x8xf32>
    %145 = vector.broadcast %9 : vector<1x8xf32> to vector<2x8xf32>
    %146 = arith.addf %144, %145 : vector<2x8xf32>
    %147 = vector.extract_strided_slice %143 {offsets = [0, 8], sizes = [2, 1], strides = [1, 1]} : vector<2x9xf32> to vector<2x1xf32>
    %148 = arith.addf %141, %147 : vector<2x1xf32>
    %149 = vector.broadcast %0 : f32 to vector<2x1xf32>
    %150 = arith.addf %148, %149 : vector<2x1xf32>
    %cst_42 = arith.constant 0.000000e+00 : f32
    %151 = vector.broadcast %cst_42 : f32 to vector<2x1xf32>
    %152 = arith.cmpf oge, %150, %151 : vector<2x1xf32>
    %cst_43 = arith.constant 0.00999999977 : f32
    %153 = vector.broadcast %cst_43 : f32 to vector<2x1xf32>
    %154 = arith.mulf %153, %150 : vector<2x1xf32>
    %155 = arith.select %152, %150, %154 : vector<2x1xi1>, vector<2x1xf32>
    %156 = vector.extract_strided_slice %135 {offsets = [0, 0], sizes = [2, 1], strides = [1, 1]} : vector<2x4xf32> to vector<2x1xf32>
    %157 = vector.broadcast %1 : f32 to vector<2x1xf32>
    %158 = arith.mulf %156, %157 : vector<2x1xf32>
    %159 = arith.addf %155, %158 : vector<2x1xf32>
    %160 = vector.broadcast %2 : f32 to vector<2x1xf32>
    %161 = arith.addf %159, %160 : vector<2x1xf32>
    %c0_44 = arith.constant 0 : index
    %c32_45 = arith.constant 32 : index
    %162 = vector.load %arg6[%c0_44, %c32_45] : memref<2x128xf32, #tpu.memory_space<vmem>>, vector<2x32xf32>
    %cst_46 = arith.constant dense<0.000000e+00> : vector<2x9xf32>
    %163 = tpu.matmul %162, %4, %cst_46 {dimension_numbers = #tpu.dot_dimension_numbers<[1], [0], [0], [1], [0, 0, 1, 1], [], []>} : vector<2x32xf32>, vector<32x9xf32>, vector<2x9xf32> -> vector<2x9xf32>
    %164 = vector.extract_strided_slice %163 {offsets = [0, 0], sizes = [2, 8], strides = [1, 1]} : vector<2x9xf32> to vector<2x8xf32>
    %165 = vector.broadcast %9 : vector<1x8xf32> to vector<2x8xf32>
    %166 = arith.addf %164, %165 : vector<2x8xf32>
    %167 = vector.extract_strided_slice %163 {offsets = [0, 8], sizes = [2, 1], strides = [1, 1]} : vector<2x9xf32> to vector<2x1xf32>
    %168 = arith.addf %141, %167 : vector<2x1xf32>
    %169 = vector.broadcast %0 : f32 to vector<2x1xf32>
    %170 = arith.addf %168, %169 : vector<2x1xf32>
    %cst_47 = arith.constant 0.000000e+00 : f32
    %171 = vector.broadcast %cst_47 : f32 to vector<2x1xf32>
    %172 = arith.cmpf oge, %170, %171 : vector<2x1xf32>
    %cst_48 = arith.constant 0.00999999977 : f32
    %173 = vector.broadcast %cst_48 : f32 to vector<2x1xf32>
    %174 = arith.mulf %173, %170 : vector<2x1xf32>
    %175 = arith.select %172, %170, %174 : vector<2x1xi1>, vector<2x1xf32>
    %176 = vector.extract_strided_slice %135 {offsets = [0, 1], sizes = [2, 1], strides = [1, 1]} : vector<2x4xf32> to vector<2x1xf32>
    %177 = vector.broadcast %1 : f32 to vector<2x1xf32>
    %178 = arith.mulf %176, %177 : vector<2x1xf32>
    %179 = arith.addf %175, %178 : vector<2x1xf32>
    %180 = vector.broadcast %2 : f32 to vector<2x1xf32>
    %181 = arith.addf %179, %180 : vector<2x1xf32>
    %c0_49 = arith.constant 0 : index
    %c64_50 = arith.constant 64 : index
    %182 = vector.load %arg6[%c0_49, %c64_50] : memref<2x128xf32, #tpu.memory_space<vmem>>, vector<2x32xf32>
    %cst_51 = arith.constant dense<0.000000e+00> : vector<2x9xf32>
    %183 = tpu.matmul %182, %4, %cst_51 {dimension_numbers = #tpu.dot_dimension_numbers<[1], [0], [0], [1], [0, 0, 1, 1], [], []>} : vector<2x32xf32>, vector<32x9xf32>, vector<2x9xf32> -> vector<2x9xf32>
    %184 = vector.extract_strided_slice %183 {offsets = [0, 0], sizes = [2, 8], strides = [1, 1]} : vector<2x9xf32> to vector<2x8xf32>
    %185 = vector.broadcast %9 : vector<1x8xf32> to vector<2x8xf32>
    %186 = arith.addf %184, %185 : vector<2x8xf32>
    %187 = vector.extract_strided_slice %183 {offsets = [0, 8], sizes = [2, 1], strides = [1, 1]} : vector<2x9xf32> to vector<2x1xf32>
    %188 = arith.addf %141, %187 : vector<2x1xf32>
    %189 = vector.broadcast %0 : f32 to vector<2x1xf32>
    %190 = arith.addf %188, %189 : vector<2x1xf32>
    %cst_52 = arith.constant 0.000000e+00 : f32
    %191 = vector.broadcast %cst_52 : f32 to vector<2x1xf32>
    %192 = arith.cmpf oge, %190, %191 : vector<2x1xf32>
    %cst_53 = arith.constant 0.00999999977 : f32
    %193 = vector.broadcast %cst_53 : f32 to vector<2x1xf32>
    %194 = arith.mulf %193, %190 : vector<2x1xf32>
    %195 = arith.select %192, %190, %194 : vector<2x1xi1>, vector<2x1xf32>
    %196 = vector.extract_strided_slice %135 {offsets = [0, 2], sizes = [2, 1], strides = [1, 1]} : vector<2x4xf32> to vector<2x1xf32>
    %197 = vector.broadcast %1 : f32 to vector<2x1xf32>
    %198 = arith.mulf %196, %197 : vector<2x1xf32>
    %199 = arith.addf %195, %198 : vector<2x1xf32>
    %200 = vector.broadcast %2 : f32 to vector<2x1xf32>
    %201 = arith.addf %199, %200 : vector<2x1xf32>
    %c0_54 = arith.constant 0 : index
    %c96_55 = arith.constant 96 : index
    %202 = vector.load %arg6[%c0_54, %c96_55] : memref<2x128xf32, #tpu.memory_space<vmem>>, vector<2x32xf32>
    %cst_56 = arith.constant dense<0.000000e+00> : vector<2x9xf32>
    %203 = tpu.matmul %202, %4, %cst_56 {dimension_numbers = #tpu.dot_dimension_numbers<[1], [0], [0], [1], [0, 0, 1, 1], [], []>} : vector<2x32xf32>, vector<32x9xf32>, vector<2x9xf32> -> vector<2x9xf32>
    %204 = vector.extract_strided_slice %203 {offsets = [0, 0], sizes = [2, 8], strides = [1, 1]} : vector<2x9xf32> to vector<2x8xf32>
    %205 = vector.broadcast %9 : vector<1x8xf32> to vector<2x8xf32>
    %206 = arith.addf %204, %205 : vector<2x8xf32>
    %207 = vector.extract_strided_slice %203 {offsets = [0, 8], sizes = [2, 1], strides = [1, 1]} : vector<2x9xf32> to vector<2x1xf32>
    %208 = arith.addf %141, %207 : vector<2x1xf32>
    %209 = vector.broadcast %0 : f32 to vector<2x1xf32>
    %210 = arith.addf %208, %209 : vector<2x1xf32>
    %cst_57 = arith.constant 0.000000e+00 : f32
    %211 = vector.broadcast %cst_57 : f32 to vector<2x1xf32>
    %212 = arith.cmpf oge, %210, %211 : vector<2x1xf32>
    %cst_58 = arith.constant 0.00999999977 : f32
    %213 = vector.broadcast %cst_58 : f32 to vector<2x1xf32>
    %214 = arith.mulf %213, %210 : vector<2x1xf32>
    %215 = arith.select %212, %210, %214 : vector<2x1xi1>, vector<2x1xf32>
    %216 = vector.extract_strided_slice %135 {offsets = [0, 3], sizes = [2, 1], strides = [1, 1]} : vector<2x4xf32> to vector<2x1xf32>
    %217 = vector.broadcast %1 : f32 to vector<2x1xf32>
    %218 = arith.mulf %216, %217 : vector<2x1xf32>
    %219 = arith.addf %215, %218 : vector<2x1xf32>
    %220 = vector.broadcast %2 : f32 to vector<2x1xf32>
    %221 = arith.addf %219, %220 : vector<2x1xf32>
    %222 = arith.maximumf %161, %181 : vector<2x1xf32>
    %223 = arith.maximumf %222, %201 : vector<2x1xf32>
    %224 = arith.maximumf %223, %221 : vector<2x1xf32>
    %225 = arith.subf %161, %224 : vector<2x1xf32>
    %226 = math.exp %225 : vector<2x1xf32>
    %227 = arith.subf %181, %224 : vector<2x1xf32>
    %228 = math.exp %227 : vector<2x1xf32>
    %229 = arith.subf %201, %224 : vector<2x1xf32>
    %230 = math.exp %229 : vector<2x1xf32>
    %231 = arith.subf %221, %224 : vector<2x1xf32>
    %232 = math.exp %231 : vector<2x1xf32>
    %233 = arith.addf %226, %228 : vector<2x1xf32>
    %234 = arith.addf %233, %230 : vector<2x1xf32>
    %235 = arith.addf %234, %232 : vector<2x1xf32>
    %236 = tpu.reciprocal %235 {approx = true} : vector<2x1xf32> -> vector<2x1xf32>
    %237 = arith.mulf %226, %236 : vector<2x1xf32>
    %238 = vector.broadcast %237 : vector<2x1xf32> to vector<2x8xf32>
    %239 = arith.mulf %238, %146 : vector<2x8xf32>
    %240 = arith.mulf %228, %236 : vector<2x1xf32>
    %241 = vector.broadcast %240 : vector<2x1xf32> to vector<2x8xf32>
    %242 = arith.mulf %241, %166 : vector<2x8xf32>
    %243 = arith.addf %239, %242 : vector<2x8xf32>
    %244 = arith.mulf %230, %236 : vector<2x1xf32>
    %245 = vector.broadcast %244 : vector<2x1xf32> to vector<2x8xf32>
    %246 = arith.mulf %245, %186 : vector<2x8xf32>
    %247 = arith.addf %243, %246 : vector<2x8xf32>
    %248 = arith.mulf %232, %236 : vector<2x1xf32>
    %249 = vector.broadcast %248 : vector<2x1xf32> to vector<2x8xf32>
    %250 = arith.mulf %249, %206 : vector<2x8xf32>
    %251 = arith.addf %247, %250 : vector<2x8xf32>
    %252 = arith.mulf %251, %140 : vector<2x8xf32>
    %cst_59 = arith.constant 0.000000e+00 : f32
    %253 = vector.broadcast %cst_59 : f32 to vector<2x8xf32>
    %254 = arith.maximumf %252, %253 : vector<2x8xf32>
    %c0_60 = arith.constant 0 : index
    %c0_61 = arith.constant 0 : index
    %255 = vector.load %arg2[%c0_60, %c0_61] : memref<2x32xf32, #tpu.memory_space<vmem>>, vector<2x32xf32>
    %cst_62 = arith.constant dense<0.000000e+00> : vector<2x24xf32>
    %256 = tpu.matmul %255, %5, %cst_62 {dimension_numbers = #tpu.dot_dimension_numbers<[1], [0], [0], [1], [0, 0, 1, 1], [], []>} : vector<2x32xf32>, vector<32x24xf32>, vector<2x24xf32> -> vector<2x24xf32>
    %cst_63 = arith.constant dense<0.000000e+00> : vector<2x24xf32>
    %257 = tpu.matmul %134, %6, %cst_63 {dimension_numbers = #tpu.dot_dimension_numbers<[1], [0], [0], [1], [0, 0, 1, 1], [], []>} : vector<2x8xf32>, vector<8x24xf32>, vector<2x24xf32> -> vector<2x24xf32>
    %258 = arith.addf %256, %257 : vector<2x24xf32>
    %cst_64 = arith.constant dense<0.000000e+00> : vector<2x24xf32>
    %259 = tpu.matmul %254, %7, %cst_64 {dimension_numbers = #tpu.dot_dimension_numbers<[1], [0], [0], [1], [0, 0, 1, 1], [], []>} : vector<2x8xf32>, vector<8x24xf32>, vector<2x24xf32> -> vector<2x24xf32>
    %260 = arith.addf %258, %259 : vector<2x24xf32>
    %261 = vector.broadcast %14 : vector<2x1xf32> to vector<2x24xf32>
    %262 = vector.broadcast %10 : vector<1x24xf32> to vector<2x24xf32>
    %263 = arith.mulf %261, %262 : vector<2x24xf32>
    %264 = arith.addf %260, %263 : vector<2x24xf32>
    %265 = vector.broadcast %11 : vector<1x24xf32> to vector<2x24xf32>
    %266 = arith.addf %264, %265 : vector<2x24xf32>
    %cst_65 = arith.constant 5.000000e-01 : f32
    %267 = vector.broadcast %cst_65 : f32 to vector<2x24xf32>
    %268 = arith.mulf %267, %266 : vector<2x24xf32>
    %cst_66 = arith.constant 0.707106769 : f32
    %269 = vector.broadcast %cst_66 : f32 to vector<2x24xf32>
    %270 = arith.mulf %266, %269 : vector<2x24xf32>
    %271 = math.erf %270 : vector<2x24xf32>
    %cst_67 = arith.constant 1.000000e+00 : f32
    %272 = vector.broadcast %cst_67 : f32 to vector<2x24xf32>
    %273 = arith.addf %272, %271 : vector<2x24xf32>
    %274 = arith.mulf %268, %273 : vector<2x24xf32>
    %cst_68 = arith.constant dense<0.000000e+00> : vector<2x2xf32>
    %275 = tpu.matmul %274, %8, %cst_68 {dimension_numbers = #tpu.dot_dimension_numbers<[1], [0], [0], [1], [0, 0, 1, 1], [], []>} : vector<2x24xf32>, vector<24x2xf32>, vector<2x2xf32> -> vector<2x2xf32>
    %276 = vector.broadcast %12 : vector<1x2xf32> to vector<2x2xf32>
    %277 = arith.addf %275, %276 : vector<2x2xf32>
    %cst_69 = arith.constant dense<0xFF800000> : vector<2xf32>
    %278 = vector.multi_reduction <maximumf>, %277, %cst_69 [1] : vector<2x2xf32> to vector<2xf32>
    %279 = vector.shape_cast %278 : vector<2xf32> to vector<2x1xf32>
    %280 = vector.broadcast %279 : vector<2x1xf32> to vector<2x2xf32>
    %281 = arith.subf %277, %280 : vector<2x2xf32>
    %282 = math.exp %281 : vector<2x2xf32>
    %cst_70 = arith.constant dense<0.000000e+00> : vector<2xf32>
    %283 = vector.multi_reduction <add>, %282, %cst_70 [1] : vector<2x2xf32> to vector<2xf32>
    %284 = vector.shape_cast %283 : vector<2xf32> to vector<2x1xf32>
    %285 = math.log %284 : vector<2x1xf32>
    %286 = arith.addf %279, %285 : vector<2x1xf32>
    %287 = vector.broadcast %286 : vector<2x1xf32> to vector<2x2xf32>
    %288 = arith.subf %277, %287 : vector<2x2xf32>
    %c0_71 = arith.constant 0 : index
    %c0_72 = arith.constant 0 : index
    %289 = vector.load %arg9[%c0_71, %c0_72] : memref<2x2xf32, #tpu.memory_space<vmem>>, vector<2x2xf32>
    tpu.vector_store %arg9[%c0_71, %c0_72], %288 {strides = array<i32>} : memref<2x2xf32, #tpu.memory_space<vmem>>, vector<2x2xf32>,
    return
  }
  func.func @transform_0(%arg0: i32) -> i32 {
    %c0_i32 = arith.constant 0 : i32
    %c0_i32_0 = arith.constant 0 : i32
    return %c0_i32 : i32
  }
  func.func @transform_1(%arg0: i32) -> (i32, i32) {
    %c0_i32 = arith.constant 0 : i32
    %c0_i32_0 = arith.constant 0 : i32
    return %arg0, %c0_i32 : i32, i32
  }
  func.func @transform_2(%arg0: i32) -> (i32, i32) {
    %c0_i32 = arith.constant 0 : i32
    %c0_i32_0 = arith.constant 0 : i32
    return %arg0, %c0_i32 : i32, i32
  }
  func.func @transform_3(%arg0: i32) -> (i32, i32) {
    %c0_i32 = arith.constant 0 : i32
    %c0_i32_0 = arith.constant 0 : i32
    return %arg0, %c0_i32 : i32, i32
  }
  func.func @transform_4(%arg0: i32) -> (i32, i32) {
    %c0_i32 = arith.constant 0 : i32
    %c0_i32_0 = arith.constant 0 : i32
    return %arg0, %c0_i32 : i32, i32
  }
  func.func @transform_5(%arg0: i32) -> (i32, i32) {
    %c0_i32 = arith.constant 0 : i32
    %c0_i32_0 = arith.constant 0 : i32
    return %arg0, %c0_i32 : i32, i32
  }
  func.func @transform_6(%arg0: i32) -> (i32, i32) {
    %c0_i32 = arith.constant 0 : i32
    %c0_i32_0 = arith.constant 0 : i32
    return %arg0, %c0_i32 : i32, i32
  }
  func.func @transform_7(%arg0: i32) -> (i32, i32) {
    %c0_i32 = arith.constant 0 : i32
    %c0_i32_0 = arith.constant 0 : i32
    %c0_i32_1 = arith.constant 0 : i32
    return %c0_i32, %c0_i32_0 : i32, i32
  }
  func.func @transform_8(%arg0: i32) -> (i32, i32) {
    %c0_i32 = arith.constant 0 : i32
    %c0_i32_0 = arith.constant 0 : i32
    return %arg0, %c0_i32 : i32, i32
  }
}

</mosaic_0001>

<llo_original>
// kernel: tpu_custom_call.1
$region0: #{tpu_custom_call.1}
  #allocation0 [shape = 'u32[]', space=smem, size = 0x4, offset = 0x4, fixed_abs, tag = 'smem constant byte address 0x4 - core index']
  #allocation1 [shape = 'u32[144,128]{1,0:T(1,128)}', space=vmem, size = 0x12000, scoped, tag = 'internal scratch']
  %s0 = inlined_call_operand.vmem [shape: f32[3], index: 0, kind: input, shape index: {}]
  %s1 = inlined_call_operand.vmem [shape: f32[2,32], index: 1, kind: input, shape index: {}]
  %s2 = inlined_call_operand.vmem [shape: f32[2,32], index: 2, kind: input, shape index: {}]
  %s3 = inlined_call_operand.vmem [shape: f32[2,32], index: 3, kind: input, shape index: {}]
  %s4 = inlined_call_operand.vmem [shape: f32[2,128], index: 4, kind: input, shape index: {}]
  %s5 = inlined_call_operand.vmem [shape: f32[2,128], index: 5, kind: input, shape index: {}]
  %s6 = inlined_call_operand.vmem [shape: f32[2,9], index: 6, kind: input, shape index: {}]
  %s7 = inlined_call_operand.vmem [shape: f32[168,24], index: 7, kind: input, shape index: {}]
  %s8 = inlined_call_operand.hbm [shape: f32[2,2], index: 8, kind: output, shape index: {}]
  %s9 = sld [smem:[#allocation0]]
  $region46: #{tpu_custom_call.1} parent=0
    _
  %s11 = ssub.s32 1, %s9
  %s12 = scalar_select 0, %s11, %s9
  $region1: #{tpu_custom_call.1} parent=0
    #allocation2 [shape = 'u8[512]{0}', space=smem, size = 0x200, scoped, tag = 'input window, operand 0, single buffered']
    #allocation3 [shape = 's32[1]{0}', space=sflag, size = 0x4, scoped, tag = 'scoped memory for tpu_custom_call.1']
    #allocation4 [shape = 's32[1]{0}', space=sflag, size = 0x4, scoped, tag = 'scoped memory for tpu_custom_call.1']
    #allocation5 [shape = 'u8[1024]{0}', space=vmem, size = 0x400, scoped, tag = 'output window, operand 0, single buffered']
    %13 = vsyncpa [#allocation4], 0
    %14 = vsyncpa [#allocation3], 0
    // Predicated region
    $region2: #{tpu_custom_call.1} parent=1 // pred_check
      _
    $region3: #{tpu_custom_call.1} parent=1 // pred_check_branch
      %16 = sbr.rel (0) target = $region5
    $region4: #{tpu_custom_call.1} parent=1 // pred_region
      %s18 = ssub.s32 16, 16
      %19 = vsyncadd [#allocation4], %s18
      %s21 = sshll.u32 %s0, 4
      %s22 = int_to_ptr.vmem [resolvable:$true] %s21
      %24 = dma.vmem_to_smem %s22, 16, [#allocation2], [#allocation4]
    $region5: #{tpu_custom_call.1} parent=1 // pred_fallthru
      _
    // Predicated region
    $region6: #{tpu_custom_call.1} parent=1 // pred_check
      _
    $region7: #{tpu_custom_call.1} parent=1 // pred_check_branch
      %26 = sbr.rel (0) target = $region9
    $region8: #{tpu_custom_call.1} parent=1 // pred_region
      _
    $region9: #{tpu_custom_call.1} parent=1 // pred_fallthru
      _
    // Predicated region
    $region10: #{tpu_custom_call.1} parent=1 // pred_check
      _
    $region11: #{tpu_custom_call.1} parent=1 // pred_check_branch
      %28 = sbr.rel (0) target = $region13
    $region12: #{tpu_custom_call.1} parent=1 // pred_region
      _
    $region13: #{tpu_custom_call.1} parent=1 // pred_fallthru
      _
    // Predicated region
    $region14: #{tpu_custom_call.1} parent=1 // pred_check
      _
    $region15: #{tpu_custom_call.1} parent=1 // pred_check_branch
      %30 = sbr.rel (0) target = $region17
    $region16: #{tpu_custom_call.1} parent=1 // pred_region
      _
    $region17: #{tpu_custom_call.1} parent=1 // pred_fallthru
      _
    // Predicated region
    $region18: #{tpu_custom_call.1} parent=1 // pred_check
      _
    $region19: #{tpu_custom_call.1} parent=1 // pred_check_branch
      %32 = sbr.rel (0) target = $region21
    $region20: #{tpu_custom_call.1} parent=1 // pred_region
      _
    $region21: #{tpu_custom_call.1} parent=1 // pred_fallthru
      _
    // Predicated region
    $region22: #{tpu_custom_call.1} parent=1 // pred_check
      _
    $region23: #{tpu_custom_call.1} parent=1 // pred_check_branch
      %34 = sbr.rel (0) target = $region25
    $region24: #{tpu_custom_call.1} parent=1 // pred_region
      _
    $region25: #{tpu_custom_call.1} parent=1 // pred_fallthru
      _
    // Predicated region
    $region26: #{tpu_custom_call.1} parent=1 // pred_check
      _
    $region27: #{tpu_custom_call.1} parent=1 // pred_check_branch
      %36 = sbr.rel (0) target = $region29
    $region28: #{tpu_custom_call.1} parent=1 // pred_region
      _
    $region29: #{tpu_custom_call.1} parent=1 // pred_fallthru
      _
    // Predicated region
    $region30: #{tpu_custom_call.1} parent=1 // pred_check
      _
    $region31: #{tpu_custom_call.1} parent=1 // pred_check_branch
      %38 = sbr.rel (0) target = $region33
    $region32: #{tpu_custom_call.1} parent=1 // pred_region
      _
    $region33: #{tpu_custom_call.1} parent=1 // pred_fallthru
      _
    // Predicated region
    $region34: #{tpu_custom_call.1} parent=1 // pred_check
      _
    $region35: #{tpu_custom_call.1} parent=1 // pred_check_branch
      %40 = sbr.rel (0) target = $region37
    $region36: #{tpu_custom_call.1} parent=1 // pred_region
      %41 = dma.done [#allocation4], 16
    $region37: #{tpu_custom_call.1} parent=1 // pred_fallthru
      _
    %42 = sfence
    %s43 = sld [smem:[#allocation2]]
    %s44 = sld [smem:[#allocation2 + $0x1]]
    %s45 = sld [smem:[#allocation2 + $0x2]]
    %v46 = vld [vmem:[%s7] sm:$0xff]
    %v47 = vld [vmem:[%s7 + $0x8] sm:$0xff]
    %v48 = vld [vmem:[%s7 + $0x10] sm:$0xff]
    %v49 = vld [vmem:[%s7 + $0x18] sm:$0xff]
    %v50 = vld [vmem:[%s7 + $0x20] sm:$0xff]
    %v51 = vld [vmem:[%s7 + $0x28] sm:$0xff]
    %v52 = vld [vmem:[%s7 + $0x30] sm:$0xff]
    %v53 = vld [vmem:[%s7 + $0x38] sm:$0xff]
    %v54 = vld [vmem:[%s7 + $0x40] sm:$0xff]
    %v55 = vld [vmem:[%s7 + $0x48] sm:$0xff]
    %v56 = vld [vmem:[%s7 + $0x50] sm:$0xff]
    %v57 = vld [vmem:[%s7 + $0x58] sm:$0xff]
    %v58 = vld [vmem:[%s7 + $0x60] sm:$0xff]
    %v59 = vld [vmem:[%s7 + $0x68] sm:$0xff]
    %v60 = vld [vmem:[%s7 + $0x70] sm:$0xff]
    %v61 = vld [vmem:[%s7 + $0x78] sm:$0xff]
    %v62 = vld [vmem:[%s7 + $0x80] sm:$0xff]
    %v63 = vld [vmem:[%s7 + $0x88] sm:$0x1]
    %v64 = vld [vmem:[%s7 + $0x90] sm:$0x1]
    %v65 = vld [vmem:[%s7 + $0x98] sm:$0x1]
    %v66 = vld [vmem:[%s7 + $0xa0] sm:$0x1]
    %v67 = vld [vmem:[%s6] sm:$0x3]
    %v68 = vld [vmem:[%s2] sm:$0x3]
    %vm69 = vcmask 261120
    %v71 = vsel %vm69, %v68, 0
    %73 = vmatprep.subr.mxu0 0.0
    %74 = vmatpush1.msra.mxu0 %v46
    %75 = vmatprep.subr.mxu0 0.0
    %76 = vmatpush1.msra.mxu0 %v47
    %77 = vmatprep.subr.mxu0 0.0
    %78 = vmatpush1.msra.mxu0 %v48
    %79 = vmatprep.subr.mxu0 0.0
    %80 = vmatpush1.msra.mxu0 %v49
    %81 = vmatprep.subr.mxu0 0.0
    %82 = vmatpush1.msra.mxu0 0.0
    %83 = vmatprep.subr.mxu0 0.0
    %84 = vmatpush1.msra.mxu0 0.0
    %85 = vmatprep.subr.mxu0 0.0
    %86 = vmatpush1.msra.mxu0 0.0
    %87 = vmatprep.subr.mxu0 0.0
    %88 = vmatpush1.msra.mxu0 0.0
    %89 = vmatprep.subr.mxu0 0.0
    %90 = vmatpush1.msra.mxu0 0.0
    %91 = vmatprep.subr.mxu0 0.0
    %92 = vmatpush1.msra.mxu0 0.0
    %93 = vmatprep.subr.mxu0 0.0
    %94 = vmatpush1.msra.mxu0 0.0
    %95 = vmatprep.subr.mxu0 0.0
    %96 = vmatpush1.msra.mxu0 0.0
    %97 = vmatprep.subr.mxu0 0.0
    %98 = vmatpush1.msra.mxu0 0.0
    %99 = vmatprep.subr.mxu0 0.0
    %100 = vmatpush1.msra.mxu0 0.0
    %101 = vmatprep.subr.mxu0 0.0
    %102 = vmatpush1.msra.mxu0 0.0
    %103 = vmatprep.subr.mxu0 0.0
    %104 = vmatpush1.msra.mxu0 0.0
    %105 = vmatprep.subr.mxu0 0.0
    %106 = vmatpush1.msra.mxu0 0.0
    %107 = vmatprep.subr.mxu0 0.0
    %108 = vmatpush1.msra.mxu0 0.0
    %109 = vmatprep.subr.mxu0 0.0
    %110 = vmatpush1.msra.mxu0 0.0
    %111 = vmatprep.subr.mxu0 0.0
    %112 = vmatpush1.msra.mxu0 0.0
    %113 = vmatprep.subr.mxu0 0.0
    %114 = vmatpush1.msra.mxu0 0.0
    %115 = vmatprep.subr.mxu0 0.0
    %116 = vmatpush1.msra.mxu0 0.0
    %117 = vmatprep.subr.mxu0 0.0
    %118 = vmatpush1.msra.mxu0 0.0
    %119 = vmatprep.subr.mxu0 0.0
    %120 = vmatpush1.msra.mxu0 0.0
    %121 = vmatprep.subr.mxu0 0.0
    %122 = vmatpush1.msra.mxu0 0.0
    %123 = vmatprep.subr.mxu0 0.0
    %124 = vmatpush1.msra.mxu0 0.0
    %125 = vmatprep.subr.mxu0 0.0
    %126 = vmatpush1.msra.mxu0 0.0
    %127 = vmatprep.subr.mxu0 0.0
    %128 = vmatpush1.msra.mxu0 0.0
    %129 = vmatprep.subr.mxu0 0.0
    %130 = vmatpush1.msra.mxu0 0.0
    %131 = vmatprep.subr.mxu0 0.0
    %132 = vmatpush1.msra.mxu0 0.0
    %133 = vmatprep.subr.mxu0 0.0
    %134 = vmatpush1.msra.mxu0 0.0
    %135 = vmatprep.subr.mxu0 0.0
    %136 = vmatpush1.msra.mxu0 0.0
    %137 = vmatprep.mubr.f32.mxu0 0.0
    %138 = vmatmul.mubr.f32.gmra.mrb[0].mxu0 %v71
    %v139 = vpop.f32.mrb[0].mxu0
    %v140 = vadd.f32 0.0, %v139
    %v141 = vpop.f32.mrb[0].mxu0
    %142 = vdwg.mxu0
    %v143 = vlaneseq
    %v144 = vshrl.u32 %v143, 7
    %v145 = vsub.s32 0, %v144
    %v146 = vrot.slane %v63, %v145
    %v147 = vadd.f32 %v140, %v146
    %v148 = vld [vmem:[%s4] sm:$0x3]
    %v150 = vsel %vm69, %v148, 0
    %152 = vmatprep.subr.mxu0 0.0
    %153 = vmatpush1.msra.mxu0 %v50
    %154 = vmatprep.subr.mxu0 0.0
    %155 = vmatpush1.msra.mxu0 %v51
    %156 = vmatprep.subr.mxu0 0.0
    %157 = vmatpush1.msra.mxu0 %v52
    %158 = vmatprep.subr.mxu0 0.0
    %159 = vmatpush1.msra.mxu0 %v53
    %160 = vmatprep.subr.mxu0 0.0
    %161 = vmatpush1.msra.mxu0 0.0
    %162 = vmatprep.subr.mxu0 0.0
    %163 = vmatpush1.msra.mxu0 0.0
    %164 = vmatprep.subr.mxu0 0.0
    %165 = vmatpush1.msra.mxu0 0.0
    %166 = vmatprep.subr.mxu0 0.0
    %167 = vmatpush1.msra.mxu0 0.0
    %168 = vmatprep.subr.mxu0 0.0
    %169 = vmatpush1.msra.mxu0 0.0
    %170 = vmatprep.subr.mxu0 0.0
    %171 = vmatpush1.msra.mxu0 0.0
    %172 = vmatprep.subr.mxu0 0.0
    %173 = vmatpush1.msra.mxu0 0.0
    %174 = vmatprep.subr.mxu0 0.0
    %175 = vmatpush1.msra.mxu0 0.0
    %176 = vmatprep.subr.mxu0 0.0
    %177 = vmatpush1.msra.mxu0 0.0
    %178 = vmatprep.subr.mxu0 0.0
    %179 = vmatpush1.msra.mxu0 0.0
    %180 = vmatprep.subr.mxu0 0.0
    %181 = vmatpush1.msra.mxu0 0.0
    %182 = vmatprep.subr.mxu0 0.0
    %183 = vmatpush1.msra.mxu0 0.0
    %184 = vmatprep.subr.mxu0 0.0
    %185 = vmatpush1.msra.mxu0 0.0
    %186 = vmatprep.subr.mxu0 0.0
    %187 = vmatpush1.msra.mxu0 0.0
    %188 = vmatprep.subr.mxu0 0.0
    %189 = vmatpush1.msra.mxu0 0.0
    %190 = vmatprep.subr.mxu0 0.0
    %191 = vmatpush1.msra.mxu0 0.0
    %192 = vmatprep.subr.mxu0 0.0
    %193 = vmatpush1.msra.mxu0 0.0
    %194 = vmatprep.subr.mxu0 0.0
    %195 = vmatpush1.msra.mxu0 0.0
    %196 = vmatprep.subr.mxu0 0.0
    %197 = vmatpush1.msra.mxu0 0.0
    %198 = vmatprep.subr.mxu0 0.0
    %199 = vmatpush1.msra.mxu0 0.0
    %200 = vmatprep.subr.mxu0 0.0
    %201 = vmatpush1.msra.mxu0 0.0
    %202 = vmatprep.subr.mxu0 0.0
    %203 = vmatpush1.msra.mxu0 0.0
    %204 = vmatprep.subr.mxu0 0.0
    %205 = vmatpush1.msra.mxu0 0.0
    %206 = vmatprep.subr.mxu0 0.0
    %207 = vmatpush1.msra.mxu0 0.0
    %208 = vmatprep.subr.mxu0 0.0
    %209 = vmatpush1.msra.mxu0 0.0
    %210 = vmatprep.subr.mxu0 0.0
    %211 = vmatpush1.msra.mxu0 0.0
    %212 = vmatprep.subr.mxu0 0.0
    %213 = vmatpush1.msra.mxu0 0.0
    %214 = vmatprep.subr.mxu0 0.0
    %215 = vmatpush1.msra.mxu0 0.0
    %216 = vmatprep.mubr.f32.mxu0 0.0
    %217 = vmatmul.mubr.f32.gmra.mrb[0].mxu0 %v150
    %v218 = vpop.f32.mrb[0].mxu0
    %v219 = vadd.f32 0.0, %v218
    %v220 = vpop.f32.mrb[0].mxu0
    %221 = vdwg.mxu0
    %v222 = vadd.f32 %v219, %v146
    %v223 = vadd.f32 %v140, %v219
    %v224 = vstv %s43
    %v225 = vadd.f32 %v223, %v224
    %vm226 = vcmp.ge.f32.partialorder %v225, 0.0
    %v227 = vmul.f32 %v225, 0.01
    %v228 = vsel %vm226, %v225, %v227
    %v229 = vstv %s44
    %v230 = vmul.f32 %v67, %v229
    %232 = vrot.lane.b32.xlu0 %v230, 7
    %v233 = vpop.permute.xlu0 %232
    %v235 = vadd.f32 %v228, %v233
    %v236 = vstv %s45
    %v237 = vadd.f32 %v235, %v236
    %238 = vrot.lane.b32.xlu0 %v148, 96
    %v239 = vpop.permute.xlu0 %238
    %v240 = vsel %vm69, %v239, 0
    %242 = vmatprep.subr.mxu0 0.0
    %243 = vmatpush1.msra.mxu0 %v50
    %244 = vmatprep.subr.mxu0 0.0
    %245 = vmatpush1.msra.mxu0 %v51
    %246 = vmatprep.subr.mxu0 0.0
    %247 = vmatpush1.msra.mxu0 %v52
    %248 = vmatprep.subr.mxu0 0.0
    %249 = vmatpush1.msra.mxu0 %v53
    %250 = vmatprep.subr.mxu0 0.0
    %251 = vmatpush1.msra.mxu0 0.0
    %252 = vmatprep.subr.mxu0 0.0
    %253 = vmatpush1.msra.mxu0 0.0
    %254 = vmatprep.subr.mxu0 0.0
    %255 = vmatpush1.msra.mxu0 0.0
    %256 = vmatprep.subr.mxu0 0.0
    %257 = vmatpush1.msra.mxu0 0.0
    %258 = vmatprep.subr.mxu0 0.0
    %259 = vmatpush1.msra.mxu0 0.0
    %260 = vmatprep.subr.mxu0 0.0
    %261 = vmatpush1.msra.mxu0 0.0
    %262 = vmatprep.subr.mxu0 0.0
    %263 = vmatpush1.msra.mxu0 0.0
    %264 = vmatprep.subr.mxu0 0.0
    %265 = vmatpush1.msra.mxu0 0.0
    %266 = vmatprep.subr.mxu0 0.0
    %267 = vmatpush1.msra.mxu0 0.0
    %268 = vmatprep.subr.mxu0 0.0
    %269 = vmatpush1.msra.mxu0 0.0
    %270 = vmatprep.subr.mxu0 0.0
    %271 = vmatpush1.msra.mxu0 0.0
    %272 = vmatprep.subr.mxu0 0.0
    %273 = vmatpush1.msra.mxu0 0.0
    %274 = vmatprep.subr.mxu0 0.0
    %275 = vmatpush1.msra.mxu0 0.0
    %276 = vmatprep.subr.mxu0 0.0
    %277 = vmatpush1.msra.mxu0 0.0
    %278 = vmatprep.subr.mxu0 0.0
    %279 = vmatpush1.msra.mxu0 0.0
    %280 = vmatprep.subr.mxu0 0.0
    %281 = vmatpush1.msra.mxu0 0.0
    %282 = vmatprep.subr.mxu0 0.0
    %283 = vmatpush1.msra.mxu0 0.0
    %284 = vmatprep.subr.mxu0 0.0
    %285 = vmatpush1.msra.mxu0 0.0
    %286 = vmatprep.subr.mxu0 0.0
    %287 = vmatpush1.msra.mxu0 0.0
    %288 = vmatprep.subr.mxu0 0.0
    %289 = vmatpush1.msra.mxu0 0.0
    %290 = vmatprep.subr.mxu0 0.0
    %291 = vmatpush1.msra.mxu0 0.0
    %292 = vmatprep.subr.mxu0 0.0
    %293 = vmatpush1.msra.mxu0 0.0
    %294 = vmatprep.subr.mxu0 0.0
    %295 = vmatpush1.msra.mxu0 0.0
    %296 = vmatprep.subr.mxu0 0.0
    %297 = vmatpush1.msra.mxu0 0.0
    %298 = vmatprep.subr.mxu0 0.0
    %299 = vmatpush1.msra.mxu0 0.0
    %300 = vmatprep.subr.mxu0 0.0
    %301 = vmatpush1.msra.mxu0 0.0
    %302 = vmatprep.subr.mxu0 0.0
    %303 = vmatpush1.msra.mxu0 0.0
    %304 = vmatprep.subr.mxu0 0.0
    %305 = vmatpush1.msra.mxu0 0.0
    %306 = vmatprep.mubr.f32.mxu0 0.0
    %307 = vmatmul.mubr.f32.gmra.mrb[0].mxu0 %v240
    %v308 = vpop.f32.mrb[0].mxu0
    %v309 = vadd.f32 0.0, %v308
    %v310 = vpop.f32.mrb[0].mxu0
    %311 = vdwg.mxu0
    %v312 = vadd.f32 %v309, %v146
    %v313 = vadd.f32 %v140, %v309
    %v314 = vadd.f32 %v313, %v224
    %vm315 = vcmp.ge.f32.partialorder %v314, 0.0
    %v316 = vmul.f32 %v314, 0.01
    %v317 = vsel %vm315, %v314, %v316
    %318 = vrot.lane.b32.xlu0 %v230, 6
    %v319 = vpop.permute.xlu0 %318
    %v321 = vadd.f32 %v317, %v319
    %v322 = vadd.f32 %v321, %v236
    %323 = vrot.lane.b32.xlu0 %v148, 64
    %v324 = vpop.permute.xlu0 %323
    %v325 = vsel %vm69, %v324, 0
    %327 = vmatprep.subr.mxu0 0.0
    %328 = vmatpush1.msra.mxu0 %v50
    %329 = vmatprep.subr.mxu0 0.0
    %330 = vmatpush1.msra.mxu0 %v51
    %331 = vmatprep.subr.mxu0 0.0
    %332 = vmatpush1.msra.mxu0 %v52
    %333 = vmatprep.subr.mxu0 0.0
    %334 = vmatpush1.msra.mxu0 %v53
    %335 = vmatprep.subr.mxu0 0.0
    %336 = vmatpush1.msra.mxu0 0.0
    %337 = vmatprep.subr.mxu0 0.0
    %338 = vmatpush1.msra.mxu0 0.0
    %339 = vmatprep.subr.mxu0 0.0
    %340 = vmatpush1.msra.mxu0 0.0
    %341 = vmatprep.subr.mxu0 0.0
    %342 = vmatpush1.msra.mxu0 0.0
    %343 = vmatprep.subr.mxu0 0.0
    %344 = vmatpush1.msra.mxu0 0.0
    %345 = vmatprep.subr.mxu0 0.0
    %346 = vmatpush1.msra.mxu0 0.0
    %347 = vmatprep.subr.mxu0 0.0
    %348 = vmatpush1.msra.mxu0 0.0
    %349 = vmatprep.subr.mxu0 0.0
    %350 = vmatpush1.msra.mxu0 0.0
    %351 = vmatprep.subr.mxu0 0.0
    %352 = vmatpush1.msra.mxu0 0.0
    %353 = vmatprep.subr.mxu0 0.0
    %354 = vmatpush1.msra.mxu0 0.0
    %355 = vmatprep.subr.mxu0 0.0
    %356 = vmatpush1.msra.mxu0 0.0
    %357 = vmatprep.subr.mxu0 0.0
    %358 = vmatpush1.msra.mxu0 0.0
    %359 = vmatprep.subr.mxu0 0.0
    %360 = vmatpush1.msra.mxu0 0.0
    %361 = vmatprep.subr.mxu0 0.0
    %362 = vmatpush1.msra.mxu0 0.0
    %363 = vmatprep.subr.mxu0 0.0
    %364 = vmatpush1.msra.mxu0 0.0
    %365 = vmatprep.subr.mxu0 0.0
    %366 = vmatpush1.msra.mxu0 0.0
    %367 = vmatprep.subr.mxu0 0.0
    %368 = vmatpush1.msra.mxu0 0.0
    %369 = vmatprep.subr.mxu0 0.0
    %370 = vmatpush1.msra.mxu0 0.0
    %371 = vmatprep.subr.mxu0 0.0
    %372 = vmatpush1.msra.mxu0 0.0
    %373 = vmatprep.subr.mxu0 0.0
    %374 = vmatpush1.msra.mxu0 0.0
    %375 = vmatprep.subr.mxu0 0.0
    %376 = vmatpush1.msra.mxu0 0.0
    %377 = vmatprep.subr.mxu0 0.0
    %378 = vmatpush1.msra.mxu0 0.0
    %379 = vmatprep.subr.mxu0 0.0
    %380 = vmatpush1.msra.mxu0 0.0
    %381 = vmatprep.subr.mxu0 0.0
    %382 = vmatpush1.msra.mxu0 0.0
    %383 = vmatprep.subr.mxu0 0.0
    %384 = vmatpush1.msra.mxu0 0.0
    %385 = vmatprep.subr.mxu0 0.0
    %386 = vmatpush1.msra.mxu0 0.0
    %387 = vmatprep.subr.mxu0 0.0
    %388 = vmatpush1.msra.mxu0 0.0
    %389 = vmatprep.subr.mxu0 0.0
    %390 = vmatpush1.msra.mxu0 0.0
    %391 = vmatprep.mubr.f32.mxu0 0.0
    %392 = vmatmul.mubr.f32.gmra.mrb[0].mxu0 %v325
    %v393 = vpop.f32.mrb[0].mxu0
    %v394 = vadd.f32 0.0, %v393
    %v395 = vpop.f32.mrb[0].mxu0
    %396 = vdwg.mxu0
    %v397 = vadd.f32 %v394, %v146
    %v398 = vadd.f32 %v140, %v394
    %v399 = vadd.f32 %v398, %v224
    %vm400 = vcmp.ge.f32.partialorder %v399, 0.0
    %v401 = vmul.f32 %v399, 0.01
    %v402 = vsel %vm400, %v399, %v401
    %403 = vrot.lane.b32.xlu0 %v230, 5
    %v404 = vpop.permute.xlu0 %403
    %v406 = vadd.f32 %v402, %v404
    %v407 = vadd.f32 %v406, %v236
    %408 = vrot.lane.b32.xlu0 %v148, 32
    %v409 = vpop.permute.xlu0 %408
    %v410 = vsel %vm69, %v409, 0
    %412 = vmatprep.subr.mxu0 0.0
    %413 = vmatpush1.msra.mxu0 %v50
    %414 = vmatprep.subr.mxu0 0.0
    %415 = vmatpush1.msra.mxu0 %v51
    %416 = vmatprep.subr.mxu0 0.0
    %417 = vmatpush1.msra.mxu0 %v52
    %418 = vmatprep.subr.mxu0 0.0
    %419 = vmatpush1.msra.mxu0 %v53
    %420 = vmatprep.subr.mxu0 0.0
    %421 = vmatpush1.msra.mxu0 0.0
    %422 = vmatprep.subr.mxu0 0.0
    %423 = vmatpush1.msra.mxu0 0.0
    %424 = vmatprep.subr.mxu0 0.0
    %425 = vmatpush1.msra.mxu0 0.0
    %426 = vmatprep.subr.mxu0 0.0
    %427 = vmatpush1.msra.mxu0 0.0
    %428 = vmatprep.subr.mxu0 0.0
    %429 = vmatpush1.msra.mxu0 0.0
    %430 = vmatprep.subr.mxu0 0.0
    %431 = vmatpush1.msra.mxu0 0.0
    %432 = vmatprep.subr.mxu0 0.0
    %433 = vmatpush1.msra.mxu0 0.0
    %434 = vmatprep.subr.mxu0 0.0
    %435 = vmatpush1.msra.mxu0 0.0
    %436 = vmatprep.subr.mxu0 0.0
    %437 = vmatpush1.msra.mxu0 0.0
    %438 = vmatprep.subr.mxu0 0.0
    %439 = vmatpush1.msra.mxu0 0.0
    %440 = vmatprep.subr.mxu0 0.0
    %441 = vmatpush1.msra.mxu0 0.0
    %442 = vmatprep.subr.mxu0 0.0
    %443 = vmatpush1.msra.mxu0 0.0
    %444 = vmatprep.subr.mxu0 0.0
    %445 = vmatpush1.msra.mxu0 0.0
    %446 = vmatprep.subr.mxu0 0.0
    %447 = vmatpush1.msra.mxu0 0.0
    %448 = vmatprep.subr.mxu0 0.0
    %449 = vmatpush1.msra.mxu0 0.0
    %450 = vmatprep.subr.mxu0 0.0
    %451 = vmatpush1.msra.mxu0 0.0
    %452 = vmatprep.subr.mxu0 0.0
    %453 = vmatpush1.msra.mxu0 0.0
    %454 = vmatprep.subr.mxu0 0.0
    %455 = vmatpush1.msra.mxu0 0.0
    %456 = vmatprep.subr.mxu0 0.0
    %457 = vmatpush1.msra.mxu0 0.0
    %458 = vmatprep.subr.mxu0 0.0
    %459 = vmatpush1.msra.mxu0 0.0
    %460 = vmatprep.subr.mxu0 0.0
    %461 = vmatpush1.msra.mxu0 0.0
    %462 = vmatprep.subr.mxu0 0.0
    %463 = vmatpush1.msra.mxu0 0.0
    %464 = vmatprep.subr.mxu0 0.0
    %465 = vmatpush1.msra.mxu0 0.0
    %466 = vmatprep.subr.mxu0 0.0
    %467 = vmatpush1.msra.mxu0 0.0
    %468 = vmatprep.subr.mxu0 0.0
    %469 = vmatpush1.msra.mxu0 0.0
    %470 = vmatprep.subr.mxu0 0.0
    %471 = vmatpush1.msra.mxu0 0.0
    %472 = vmatprep.subr.mxu0 0.0
    %473 = vmatpush1.msra.mxu0 0.0
    %474 = vmatprep.subr.mxu0 0.0
    %475 = vmatpush1.msra.mxu0 0.0
    %476 = vmatprep.mubr.f32.mxu0 0.0
    %477 = vmatmul.mubr.f32.gmra.mrb[0].mxu0 %v410
    %v478 = vpop.f32.mrb[0].mxu0
    %v479 = vadd.f32 0.0, %v478
    %v480 = vpop.f32.mrb[0].mxu0
    %481 = vdwg.mxu0
    %v482 = vadd.f32 %v479, %v146
    %v483 = vadd.f32 %v140, %v479
    %v484 = vadd.f32 %v483, %v224
    %vm485 = vcmp.ge.f32.partialorder %v484, 0.0
    %v486 = vmul.f32 %v484, 0.01
    %v487 = vsel %vm485, %v484, %v486
    %488 = vrot.lane.b32.xlu0 %v230, 4
    %v489 = vpop.permute.xlu0 %488
    %v491 = vadd.f32 %v487, %v489
    %v492 = vadd.f32 %v491, %v236
    %v493 = vmax.f32 %v237, %v322
    %v494 = vmax.f32 %v493, %v407
    %v495 = vmax.f32 %v494, %v492
    %v496 = vsub.f32 %v237, %v495
    %v497 = vmul.f32 %v496, 1.442695
    %v498 = vpow.pop %v497
    %v499 = vsub.f32 %v322, %v495
    %v500 = vmul.f32 %v499, 1.442695
    %v501 = vpow.pop %v500
    %v502 = vsub.f32 %v407, %v495
    %v503 = vmul.f32 %v502, 1.442695
    %v504 = vpow.pop %v503
    %v505 = vsub.f32 %v492, %v495
    %v506 = vmul.f32 %v505, 1.442695
    %v507 = vpow.pop %v506
    %v508 = vadd.f32 %v498, %v501
    %v509 = vadd.f32 %v508, %v504
    %v510 = vadd.f32 %v509, %v507
    %v511 = vrcp.pop %v510
    %v512 = vmul.f32 %v498, %v511
    %514 = vset.pattern.permute.xlu0 8
    %515 = vperm.xlu0 %514, %v512
    %v516 = vpop.permute.xlu0 %515
    %v518 = vmul.f32 %v516, %v222
    %v519 = vmul.f32 %v501, %v511
    %521 = vset.pattern.permute.xlu0 8
    %522 = vperm.xlu0 %521, %v519
    %v523 = vpop.permute.xlu0 %522
    %v525 = vmul.f32 %v523, %v312
    %v526 = vadd.f32 %v518, %v525
    %v527 = vmul.f32 %v504, %v511
    %529 = vset.pattern.permute.xlu0 8
    %530 = vperm.xlu0 %529, %v527
    %v531 = vpop.permute.xlu0 %530
    %v533 = vmul.f32 %v531, %v397
    %v534 = vadd.f32 %v526, %v533
    %v535 = vmul.f32 %v507, %v511
    %537 = vset.pattern.permute.xlu0 8
    %538 = vperm.xlu0 %537, %v535
    %v539 = vpop.permute.xlu0 %538
    %v541 = vmul.f32 %v539, %v482
    %v542 = vadd.f32 %v534, %v541
    %v543 = vmul.f32 %v542, %v147
    %v544 = vmax.f32 %v543, 0.0
    %v545 = vld [vmem:[%s3] sm:$0x3]
    %v547 = vsel %vm69, %v545, 0
    %549 = vmatprep.subr.mxu0 0.0
    %550 = vmatpush1.msra.mxu0 %v46
    %551 = vmatprep.subr.mxu0 0.0
    %552 = vmatpush1.msra.mxu0 %v47
    %553 = vmatprep.subr.mxu0 0.0
    %554 = vmatpush1.msra.mxu0 %v48
    %555 = vmatprep.subr.mxu0 0.0
    %556 = vmatpush1.msra.mxu0 %v49
    %557 = vmatprep.subr.mxu0 0.0
    %558 = vmatpush1.msra.mxu0 0.0
    %559 = vmatprep.subr.mxu0 0.0
    %560 = vmatpush1.msra.mxu0 0.0
    %561 = vmatprep.subr.mxu0 0.0
    %562 = vmatpush1.msra.mxu0 0.0
    %563 = vmatprep.subr.mxu0 0.0
    %564 = vmatpush1.msra.mxu0 0.0
    %565 = vmatprep.subr.mxu0 0.0
    %566 = vmatpush1.msra.mxu0 0.0
    %567 = vmatprep.subr.mxu0 0.0
    %568 = vmatpush1.msra.mxu0 0.0
    %569 = vmatprep.subr.mxu0 0.0
    %570 = vmatpush1.msra.mxu0 0.0
    %571 = vmatprep.subr.mxu0 0.0
    %572 = vmatpush1.msra.mxu0 0.0
    %573 = vmatprep.subr.mxu0 0.0
    %574 = vmatpush1.msra.mxu0 0.0
    %575 = vmatprep.subr.mxu0 0.0
    %576 = vmatpush1.msra.mxu0 0.0
    %577 = vmatprep.subr.mxu0 0.0
    %578 = vmatpush1.msra.mxu0 0.0
    %579 = vmatprep.subr.mxu0 0.0
    %580 = vmatpush1.msra.mxu0 0.0
    %581 = vmatprep.subr.mxu0 0.0
    %582 = vmatpush1.msra.mxu0 0.0
    %583 = vmatprep.subr.mxu0 0.0
    %584 = vmatpush1.msra.mxu0 0.0
    %585 = vmatprep.subr.mxu0 0.0
    %586 = vmatpush1.msra.mxu0 0.0
    %587 = vmatprep.subr.mxu0 0.0
    %588 = vmatpush1.msra.mxu0 0.0
    %589 = vmatprep.subr.mxu0 0.0
    %590 = vmatpush1.msra.mxu0 0.0
    %591 = vmatprep.subr.mxu0 0.0
    %592 = vmatpush1.msra.mxu0 0.0
    %593 = vmatprep.subr.mxu0 0.0
    %594 = vmatpush1.msra.mxu0 0.0
    %595 = vmatprep.subr.mxu0 0.0
    %596 = vmatpush1.msra.mxu0 0.0
    %597 = vmatprep.subr.mxu0 0.0
    %598 = vmatpush1.msra.mxu0 0.0
    %599 = vmatprep.subr.mxu0 0.0
    %600 = vmatpush1.msra.mxu0 0.0
    %601 = vmatprep.subr.mxu0 0.0
    %602 = vmatpush1.msra.mxu0 0.0
    %603 = vmatprep.subr.mxu0 0.0
    %604 = vmatpush1.msra.mxu0 0.0
    %605 = vmatprep.subr.mxu0 0.0
    %606 = vmatpush1.msra.mxu0 0.0
    %607 = vmatprep.subr.mxu0 0.0
    %608 = vmatpush1.msra.mxu0 0.0
    %609 = vmatprep.subr.mxu0 0.0
    %610 = vmatpush1.msra.mxu0 0.0
    %611 = vmatprep.subr.mxu0 0.0
    %612 = vmatpush1.msra.mxu0 0.0
    %613 = vmatprep.mubr.f32.mxu0 0.0
    %614 = vmatmul.mubr.f32.gmra.mrb[0].mxu0 %v547
    %v615 = vpop.f32.mrb[0].mxu0
    %v616 = vadd.f32 0.0, %v615
    %v617 = vpop.f32.mrb[0].mxu0
    %618 = vdwg.mxu0
    %v619 = vadd.f32 %v616, %v146
    %v620 = vld [vmem:[%s5] sm:$0x3]
    %v622 = vsel %vm69, %v620, 0
    %624 = vmatprep.subr.mxu0 0.0
    %625 = vmatpush1.msra.mxu0 %v50
    %626 = vmatprep.subr.mxu0 0.0
    %627 = vmatpush1.msra.mxu0 %v51
    %628 = vmatprep.subr.mxu0 0.0
    %629 = vmatpush1.msra.mxu0 %v52
    %630 = vmatprep.subr.mxu0 0.0
    %631 = vmatpush1.msra.mxu0 %v53
    %632 = vmatprep.subr.mxu0 0.0
    %633 = vmatpush1.msra.mxu0 0.0
    %634 = vmatprep.subr.mxu0 0.0
    %635 = vmatpush1.msra.mxu0 0.0
    %636 = vmatprep.subr.mxu0 0.0
    %637 = vmatpush1.msra.mxu0 0.0
    %638 = vmatprep.subr.mxu0 0.0
    %639 = vmatpush1.msra.mxu0 0.0
    %640 = vmatprep.subr.mxu0 0.0
    %641 = vmatpush1.msra.mxu0 0.0
    %642 = vmatprep.subr.mxu0 0.0
    %643 = vmatpush1.msra.mxu0 0.0
    %644 = vmatprep.subr.mxu0 0.0
    %645 = vmatpush1.msra.mxu0 0.0
    %646 = vmatprep.subr.mxu0 0.0
    %647 = vmatpush1.msra.mxu0 0.0
    %648 = vmatprep.subr.mxu0 0.0
    %649 = vmatpush1.msra.mxu0 0.0
    %650 = vmatprep.subr.mxu0 0.0
    %651 = vmatpush1.msra.mxu0 0.0
    %652 = vmatprep.subr.mxu0 0.0
    %653 = vmatpush1.msra.mxu0 0.0
    %654 = vmatprep.subr.mxu0 0.0
    %655 = vmatpush1.msra.mxu0 0.0
    %656 = vmatprep.subr.mxu0 0.0
    %657 = vmatpush1.msra.mxu0 0.0
    %658 = vmatprep.subr.mxu0 0.0
    %659 = vmatpush1.msra.mxu0 0.0
    %660 = vmatprep.subr.mxu0 0.0
    %661 = vmatpush1.msra.mxu0 0.0
    %662 = vmatprep.subr.mxu0 0.0
    %663 = vmatpush1.msra.mxu0 0.0
    %664 = vmatprep.subr.mxu0 0.0
    %665 = vmatpush1.msra.mxu0 0.0
    %666 = vmatprep.subr.mxu0 0.0
    %667 = vmatpush1.msra.mxu0 0.0
    %668 = vmatprep.subr.mxu0 0.0
    %669 = vmatpush1.msra.mxu0 0.0
    %670 = vmatprep.subr.mxu0 0.0
    %671 = vmatpush1.msra.mxu0 0.0
    %672 = vmatprep.subr.mxu0 0.0
    %673 = vmatpush1.msra.mxu0 0.0
    %674 = vmatprep.subr.mxu0 0.0
    %675 = vmatpush1.msra.mxu0 0.0
    %676 = vmatprep.subr.mxu0 0.0
    %677 = vmatpush1.msra.mxu0 0.0
    %678 = vmatprep.subr.mxu0 0.0
    %679 = vmatpush1.msra.mxu0 0.0
    %680 = vmatprep.subr.mxu0 0.0
    %681 = vmatpush1.msra.mxu0 0.0
    %682 = vmatprep.subr.mxu0 0.0
    %683 = vmatpush1.msra.mxu0 0.0
    %684 = vmatprep.subr.mxu0 0.0
    %685 = vmatpush1.msra.mxu0 0.0
    %686 = vmatprep.subr.mxu0 0.0
    %687 = vmatpush1.msra.mxu0 0.0
    %688 = vmatprep.mubr.f32.mxu0 0.0
    %689 = vmatmul.mubr.f32.gmra.mrb[0].mxu0 %v622
    %v690 = vpop.f32.mrb[0].mxu0
    %v691 = vadd.f32 0.0, %v690
    %v692 = vpop.f32.mrb[0].mxu0
    %693 = vdwg.mxu0
    %v694 = vadd.f32 %v691, %v146
    %v695 = vadd.f32 %v616, %v691
    %v696 = vadd.f32 %v695, %v224
    %vm697 = vcmp.ge.f32.partialorder %v696, 0.0
    %v698 = vmul.f32 %v696, 0.01
    %v699 = vsel %vm697, %v696, %v698
    %700 = vrot.lane.b32.xlu0 %v230, 3
    %v701 = vpop.permute.xlu0 %700
    %v703 = vadd.f32 %v699, %v701
    %v704 = vadd.f32 %v703, %v236
    %705 = vrot.lane.b32.xlu0 %v620, 96
    %v706 = vpop.permute.xlu0 %705
    %v707 = vsel %vm69, %v706, 0
    %709 = vmatprep.subr.mxu0 0.0
    %710 = vmatpush1.msra.mxu0 %v50
    %711 = vmatprep.subr.mxu0 0.0
    %712 = vmatpush1.msra.mxu0 %v51
    %713 = vmatprep.subr.mxu0 0.0
    %714 = vmatpush1.msra.mxu0 %v52
    %715 = vmatprep.subr.mxu0 0.0
    %716 = vmatpush1.msra.mxu0 %v53
    %717 = vmatprep.subr.mxu0 0.0
    %718 = vmatpush1.msra.mxu0 0.0
    %719 = vmatprep.subr.mxu0 0.0
    %720 = vmatpush1.msra.mxu0 0.0
    %721 = vmatprep.subr.mxu0 0.0
    %722 = vmatpush1.msra.mxu0 0.0
    %723 = vmatprep.subr.mxu0 0.0
    %724 = vmatpush1.msra.mxu0 0.0
    %725 = vmatprep.subr.mxu0 0.0
    %726 = vmatpush1.msra.mxu0 0.0
    %727 = vmatprep.subr.mxu0 0.0
    %728 = vmatpush1.msra.mxu0 0.0
    %729 = vmatprep.subr.mxu0 0.0
    %730 = vmatpush1.msra.mxu0 0.0
    %731 = vmatprep.subr.mxu0 0.0
    %732 = vmatpush1.msra.mxu0 0.0
    %733 = vmatprep.subr.mxu0 0.0
    %734 = vmatpush1.msra.mxu0 0.0
    %735 = vmatprep.subr.mxu0 0.0
    %736 = vmatpush1.msra.mxu0 0.0
    %737 = vmatprep.subr.mxu0 0.0
    %738 = vmatpush1.msra.mxu0 0.0
    %739 = vmatprep.subr.mxu0 0.0
    %740 = vmatpush1.msra.mxu0 0.0
    %741 = vmatprep.subr.mxu0 0.0
    %742 = vmatpush1.msra.mxu0 0.0
    %743 = vmatprep.subr.mxu0 0.0
    %744 = vmatpush1.msra.mxu0 0.0
    %745 = vmatprep.subr.mxu0 0.0
    %746 = vmatpush1.msra.mxu0 0.0
    %747 = vmatprep.subr.mxu0 0.0
    %748 = vmatpush1.msra.mxu0 0.0
    %749 = vmatprep.subr.mxu0 0.0
    %750 = vmatpush1.msra.mxu0 0.0
    %751 = vmatprep.subr.mxu0 0.0
    %752 = vmatpush1.msra.mxu0 0.0
    %753 = vmatprep.subr.mxu0 0.0
    %754 = vmatpush1.msra.mxu0 0.0
    %755 = vmatprep.subr.mxu0 0.0
    %756 = vmatpush1.msra.mxu0 0.0
    %757 = vmatprep.subr.mxu0 0.0
    %758 = vmatpush1.msra.mxu0 0.0
    %759 = vmatprep.subr.mxu0 0.0
    %760 = vmatpush1.msra.mxu0 0.0
    %761 = vmatprep.subr.mxu0 0.0
    %762 = vmatpush1.msra.mxu0 0.0
    %763 = vmatprep.subr.mxu0 0.0
    %764 = vmatpush1.msra.mxu0 0.0
    %765 = vmatprep.subr.mxu0 0.0
    %766 = vmatpush1.msra.mxu0 0.0
    %767 = vmatprep.subr.mxu0 0.0
    %768 = vmatpush1.msra.mxu0 0.0
    %769 = vmatprep.subr.mxu0 0.0
    %770 = vmatpush1.msra.mxu0 0.0
    %771 = vmatprep.subr.mxu0 0.0
    %772 = vmatpush1.msra.mxu0 0.0
    %773 = vmatprep.mubr.f32.mxu0 0.0
    %774 = vmatmul.mubr.f32.gmra.mrb[0].mxu0 %v707
    %v775 = vpop.f32.mrb[0].mxu0
    %v776 = vadd.f32 0.0, %v775
    %v777 = vpop.f32.mrb[0].mxu0
    %778 = vdwg.mxu0
    %v779 = vadd.f32 %v776, %v146
    %v780 = vadd.f32 %v616, %v776
    %v781 = vadd.f32 %v780, %v224
    %vm782 = vcmp.ge.f32.partialorder %v781, 0.0
    %v783 = vmul.f32 %v781, 0.01
    %v784 = vsel %vm782, %v781, %v783
    %785 = vrot.lane.b32.xlu0 %v230, 2
    %v786 = vpop.permute.xlu0 %785
    %v788 = vadd.f32 %v784, %v786
    %v789 = vadd.f32 %v788, %v236
    %790 = vrot.lane.b32.xlu0 %v620, 64
    %v791 = vpop.permute.xlu0 %790
    %v792 = vsel %vm69, %v791, 0
    %794 = vmatprep.subr.mxu0 0.0
    %795 = vmatpush1.msra.mxu0 %v50
    %796 = vmatprep.subr.mxu0 0.0
    %797 = vmatpush1.msra.mxu0 %v51
    %798 = vmatprep.subr.mxu0 0.0
    %799 = vmatpush1.msra.mxu0 %v52
    %800 = vmatprep.subr.mxu0 0.0
    %801 = vmatpush1.msra.mxu0 %v53
    %802 = vmatprep.subr.mxu0 0.0
    %803 = vmatpush1.msra.mxu0 0.0
    %804 = vmatprep.subr.mxu0 0.0
    %805 = vmatpush1.msra.mxu0 0.0
    %806 = vmatprep.subr.mxu0 0.0
    %807 = vmatpush1.msra.mxu0 0.0
    %808 = vmatprep.subr.mxu0 0.0
    %809 = vmatpush1.msra.mxu0 0.0
    %810 = vmatprep.subr.mxu0 0.0
    %811 = vmatpush1.msra.mxu0 0.0
    %812 = vmatprep.subr.mxu0 0.0
    %813 = vmatpush1.msra.mxu0 0.0
    %814 = vmatprep.subr.mxu0 0.0
    %815 = vmatpush1.msra.mxu0 0.0
    %816 = vmatprep.subr.mxu0 0.0
    %817 = vmatpush1.msra.mxu0 0.0
    %818 = vmatprep.subr.mxu0 0.0
    %819 = vmatpush1.msra.mxu0 0.0
    %820 = vmatprep.subr.mxu0 0.0
    %821 = vmatpush1.msra.mxu0 0.0
    %822 = vmatprep.subr.mxu0 0.0
    %823 = vmatpush1.msra.mxu0 0.0
    %824 = vmatprep.subr.mxu0 0.0
    %825 = vmatpush1.msra.mxu0 0.0
    %826 = vmatprep.subr.mxu0 0.0
    %827 = vmatpush1.msra.mxu0 0.0
    %828 = vmatprep.subr.mxu0 0.0
    %829 = vmatpush1.msra.mxu0 0.0
    %830 = vmatprep.subr.mxu0 0.0
    %831 = vmatpush1.msra.mxu0 0.0
    %832 = vmatprep.subr.mxu0 0.0
    %833 = vmatpush1.msra.mxu0 0.0
    %834 = vmatprep.subr.mxu0 0.0
    %835 = vmatpush1.msra.mxu0 0.0
    %836 = vmatprep.subr.mxu0 0.0
    %837 = vmatpush1.msra.mxu0 0.0
    %838 = vmatprep.subr.mxu0 0.0
    %839 = vmatpush1.msra.mxu0 0.0
    %840 = vmatprep.subr.mxu0 0.0
    %841 = vmatpush1.msra.mxu0 0.0
    %842 = vmatprep.subr.mxu0 0.0
    %843 = vmatpush1.msra.mxu0 0.0
    %844 = vmatprep.subr.mxu0 0.0
    %845 = vmatpush1.msra.mxu0 0.0
    %846 = vmatprep.subr.mxu0 0.0
    %847 = vmatpush1.msra.mxu0 0.0
    %848 = vmatprep.subr.mxu0 0.0
    %849 = vmatpush1.msra.mxu0 0.0
    %850 = vmatprep.subr.mxu0 0.0
    %851 = vmatpush1.msra.mxu0 0.0
    %852 = vmatprep.subr.mxu0 0.0
    %853 = vmatpush1.msra.mxu0 0.0
    %854 = vmatprep.subr.mxu0 0.0
    %855 = vmatpush1.msra.mxu0 0.0
    %856 = vmatprep.subr.mxu0 0.0
    %857 = vmatpush1.msra.mxu0 0.0
    %858 = vmatprep.mubr.f32.mxu0 0.0
    %859 = vmatmul.mubr.f32.gmra.mrb[0].mxu0 %v792
    %v860 = vpop.f32.mrb[0].mxu0
    %v861 = vadd.f32 0.0, %v860
    %v862 = vpop.f32.mrb[0].mxu0
    %863 = vdwg.mxu0
    %v864 = vadd.f32 %v861, %v146
    %v865 = vadd.f32 %v616, %v861
    %v866 = vadd.f32 %v865, %v224
    %vm867 = vcmp.ge.f32.partialorder %v866, 0.0
    %v868 = vmul.f32 %v866, 0.01
    %v869 = vsel %vm867, %v866, %v868
    %870 = vrot.lane.b32.xlu0 %v230, 1
    %v871 = vpop.permute.xlu0 %870
    %v873 = vadd.f32 %v869, %v871
    %v874 = vadd.f32 %v873, %v236
    %875 = vrot.lane.b32.xlu0 %v620, 32
    %v876 = vpop.permute.xlu0 %875
    %v877 = vsel %vm69, %v876, 0
    %879 = vmatprep.subr.mxu0 0.0
    %880 = vmatpush1.msra.mxu0 %v50
    %881 = vmatprep.subr.mxu0 0.0
    %882 = vmatpush1.msra.mxu0 %v51
    %883 = vmatprep.subr.mxu0 0.0
    %884 = vmatpush1.msra.mxu0 %v52
    %885 = vmatprep.subr.mxu0 0.0
    %886 = vmatpush1.msra.mxu0 %v53
    %887 = vmatprep.subr.mxu0 0.0
    %888 = vmatpush1.msra.mxu0 0.0
    %889 = vmatprep.subr.mxu0 0.0
    %890 = vmatpush1.msra.mxu0 0.0
    %891 = vmatprep.subr.mxu0 0.0
    %892 = vmatpush1.msra.mxu0 0.0
    %893 = vmatprep.subr.mxu0 0.0
    %894 = vmatpush1.msra.mxu0 0.0
    %895 = vmatprep.subr.mxu0 0.0
    %896 = vmatpush1.msra.mxu0 0.0
    %897 = vmatprep.subr.mxu0 0.0
    %898 = vmatpush1.msra.mxu0 0.0
    %899 = vmatprep.subr.mxu0 0.0
    %900 = vmatpush1.msra.mxu0 0.0
    %901 = vmatprep.subr.mxu0 0.0
    %902 = vmatpush1.msra.mxu0 0.0
    %903 = vmatprep.subr.mxu0 0.0
    %904 = vmatpush1.msra.mxu0 0.0
    %905 = vmatprep.subr.mxu0 0.0
    %906 = vmatpush1.msra.mxu0 0.0
    %907 = vmatprep.subr.mxu0 0.0
    %908 = vmatpush1.msra.mxu0 0.0
    %909 = vmatprep.subr.mxu0 0.0
    %910 = vmatpush1.msra.mxu0 0.0
    %911 = vmatprep.subr.mxu0 0.0
    %912 = vmatpush1.msra.mxu0 0.0
    %913 = vmatprep.subr.mxu0 0.0
    %914 = vmatpush1.msra.mxu0 0.0
    %915 = vmatprep.subr.mxu0 0.0
    %916 = vmatpush1.msra.mxu0 0.0
    %917 = vmatprep.subr.mxu0 0.0
    %918 = vmatpush1.msra.mxu0 0.0
    %919 = vmatprep.subr.mxu0 0.0
    %920 = vmatpush1.msra.mxu0 0.0
    %921 = vmatprep.subr.mxu0 0.0
    %922 = vmatpush1.msra.mxu0 0.0
    %923 = vmatprep.subr.mxu0 0.0
    %924 = vmatpush1.msra.mxu0 0.0
    %925 = vmatprep.subr.mxu0 0.0
    %926 = vmatpush1.msra.mxu0 0.0
    %927 = vmatprep.subr.mxu0 0.0
    %928 = vmatpush1.msra.mxu0 0.0
    %929 = vmatprep.subr.mxu0 0.0
    %930 = vmatpush1.msra.mxu0 0.0
    %931 = vmatprep.subr.mxu0 0.0
    %932 = vmatpush1.msra.mxu0 0.0
    %933 = vmatprep.subr.mxu0 0.0
    %934 = vmatpush1.msra.mxu0 0.0
    %935 = vmatprep.subr.mxu0 0.0
    %936 = vmatpush1.msra.mxu0 0.0
    %937 = vmatprep.subr.mxu0 0.0
    %938 = vmatpush1.msra.mxu0 0.0
    %939 = vmatprep.subr.mxu0 0.0
    %940 = vmatpush1.msra.mxu0 0.0
    %941 = vmatprep.subr.mxu0 0.0
    %942 = vmatpush1.msra.mxu0 0.0
    %943 = vmatprep.mubr.f32.mxu0 0.0
    %944 = vmatmul.mubr.f32.gmra.mrb[0].mxu0 %v877
    %v945 = vpop.f32.mrb[0].mxu0
    %v946 = vadd.f32 0.0, %v945
    %v947 = vpop.f32.mrb[0].mxu0
    %948 = vdwg.mxu0
    %v949 = vadd.f32 %v946, %v146
    %v950 = vadd.f32 %v616, %v946
    %v951 = vadd.f32 %v950, %v224
    %vm952 = vcmp.ge.f32.partialorder %v951, 0.0
    %v953 = vmul.f32 %v951, 0.01
    %v954 = vsel %vm952, %v951, %v953
    %v955 = vadd.f32 %v954, %v230
    %v956 = vadd.f32 %v955, %v236
    %v957 = vmax.f32 %v704, %v789
    %v958 = vmax.f32 %v957, %v874
    %v959 = vmax.f32 %v958, %v956
    %v960 = vsub.f32 %v704, %v959
    %v961 = vmul.f32 %v960, 1.442695
    %v962 = vpow.pop %v961
    %v963 = vsub.f32 %v789, %v959
    %v964 = vmul.f32 %v963, 1.442695
    %v965 = vpow.pop %v964
    %v966 = vsub.f32 %v874, %v959
    %v967 = vmul.f32 %v966, 1.442695
    %v968 = vpow.pop %v967
    %v969 = vsub.f32 %v956, %v959
    %v970 = vmul.f32 %v969, 1.442695
    %v971 = vpow.pop %v970
    %v972 = vadd.f32 %v962, %v965
    %v973 = vadd.f32 %v972, %v968
    %v974 = vadd.f32 %v973, %v971
    %v975 = vrcp.pop %v974
    %v976 = vmul.f32 %v962, %v975
    %978 = vset.pattern.permute.xlu0 8
    %979 = vperm.xlu0 %978, %v976
    %v980 = vpop.permute.xlu0 %979
    %v982 = vmul.f32 %v980, %v694
    %v983 = vmul.f32 %v965, %v975
    %985 = vset.pattern.permute.xlu0 8
    %986 = vperm.xlu0 %985, %v983
    %v987 = vpop.permute.xlu0 %986
    %v989 = vmul.f32 %v987, %v779
    %v990 = vadd.f32 %v982, %v989
    %v991 = vmul.f32 %v968, %v975
    %993 = vset.pattern.permute.xlu0 8
    %994 = vperm.xlu0 %993, %v991
    %v995 = vpop.permute.xlu0 %994
    %v997 = vmul.f32 %v995, %v864
    %v998 = vadd.f32 %v990, %v997
    %v999 = vmul.f32 %v971, %v975
    %1001 = vset.pattern.permute.xlu0 8
    %1002 = vperm.xlu0 %1001, %v999
    %v1003 = vpop.permute.xlu0 %1002
    %v1005 = vmul.f32 %v1003, %v949
    %v1006 = vadd.f32 %v998, %v1005
    %v1007 = vmul.f32 %v1006, %v619
    %v1008 = vmax.f32 %v1007, 0.0
    %v1009 = vld [vmem:[%s1] sm:$0x3]
    %vm1010 = vcmask 64512
    %v1012 = vsel %vm1010, %v544, 0
    %1014 = vmatprep.subr.mxu0 0.0
    %1015 = vmatpush1.msra.mxu0 %v58
    %1016 = vmatprep.subr.mxu0 0.0
    %1017 = vmatpush1.msra.mxu0 0.0
    %1018 = vmatprep.subr.mxu0 0.0
    %1019 = vmatpush1.msra.mxu0 0.0
    %1020 = vmatprep.subr.mxu0 0.0
    %1021 = vmatpush1.msra.mxu0 0.0
    %1022 = vmatprep.subr.mxu0 0.0
    %1023 = vmatpush1.msra.mxu0 0.0
    %1024 = vmatprep.subr.mxu0 0.0
    %1025 = vmatpush1.msra.mxu0 0.0
    %1026 = vmatprep.subr.mxu0 0.0
    %1027 = vmatpush1.msra.mxu0 0.0
    %1028 = vmatprep.subr.mxu0 0.0
    %1029 = vmatpush1.msra.mxu0 0.0
    %1030 = vmatprep.subr.mxu0 0.0
    %1031 = vmatpush1.msra.mxu0 0.0
    %1032 = vmatprep.subr.mxu0 0.0
    %1033 = vmatpush1.msra.mxu0 0.0
    %1034 = vmatprep.subr.mxu0 0.0
    %1035 = vmatpush1.msra.mxu0 0.0
    %1036 = vmatprep.subr.mxu0 0.0
    %1037 = vmatpush1.msra.mxu0 0.0
    %1038 = vmatprep.subr.mxu0 0.0
    %1039 = vmatpush1.msra.mxu0 0.0
    %1040 = vmatprep.subr.mxu0 0.0
    %1041 = vmatpush1.msra.mxu0 0.0
    %1042 = vmatprep.subr.mxu0 0.0
    %1043 = vmatpush1.msra.mxu0 0.0
    %1044 = vmatprep.subr.mxu0 0.0
    %1045 = vmatpush1.msra.mxu0 0.0
    %1046 = vmatprep.subr.mxu0 0.0
    %1047 = vmatpush1.msra.mxu0 0.0
    %1048 = vmatprep.subr.mxu0 0.0
    %1049 = vmatpush1.msra.mxu0 0.0
    %1050 = vmatprep.subr.mxu0 0.0
    %1051 = vmatpush1.msra.mxu0 0.0
    %1052 = vmatprep.subr.mxu0 0.0
    %1053 = vmatpush1.msra.mxu0 0.0
    %1054 = vmatprep.subr.mxu0 0.0
    %1055 = vmatpush1.msra.mxu0 0.0
    %1056 = vmatprep.subr.mxu0 0.0
    %1057 = vmatpush1.msra.mxu0 0.0
    %1058 = vmatprep.subr.mxu0 0.0
    %1059 = vmatpush1.msra.mxu0 0.0
    %1060 = vmatprep.subr.mxu0 0.0
    %1061 = vmatpush1.msra.mxu0 0.0
    %1062 = vmatprep.subr.mxu0 0.0
    %1063 = vmatpush1.msra.mxu0 0.0
    %1064 = vmatprep.subr.mxu0 0.0
    %1065 = vmatpush1.msra.mxu0 0.0
    %1066 = vmatprep.subr.mxu0 0.0
    %1067 = vmatpush1.msra.mxu0 0.0
    %1068 = vmatprep.subr.mxu0 0.0
    %1069 = vmatpush1.msra.mxu0 0.0
    %1070 = vmatprep.subr.mxu0 0.0
    %1071 = vmatpush1.msra.mxu0 0.0
    %1072 = vmatprep.subr.mxu0 0.0
    %1073 = vmatpush1.msra.mxu0 0.0
    %1074 = vmatprep.subr.mxu0 0.0
    %1075 = vmatpush1.msra.mxu0 0.0
    %1076 = vmatprep.subr.mxu0 0.0
    %1077 = vmatpush1.msra.mxu0 0.0
    %1078 = vmatprep.mubr.f32.mxu0 0.0
    %1079 = vmatmul.mubr.f32.gmra.mrb[0].mxu0 %v1012
    %v1080 = vpop.f32.mrb[0].mxu0
    %v1081 = vadd.f32 0.0, %v1080
    %v1082 = vpop.f32.mrb[0].mxu0
    %1083 = vdwg.mxu0
    %v1085 = vsel %vm69, %v1009, 0
    %1087 = vmatprep.subr.mxu0 0.0
    %1088 = vmatpush1.msra.mxu0 %v54
    %1089 = vmatprep.subr.mxu0 0.0
    %1090 = vmatpush1.msra.mxu0 %v55
    %1091 = vmatprep.subr.mxu0 0.0
    %1092 = vmatpush1.msra.mxu0 %v56
    %1093 = vmatprep.subr.mxu0 0.0
    %1094 = vmatpush1.msra.mxu0 %v57
    %1095 = vmatprep.subr.mxu0 0.0
    %1096 = vmatpush1.msra.mxu0 0.0
    %1097 = vmatprep.subr.mxu0 0.0
    %1098 = vmatpush1.msra.mxu0 0.0
    %1099 = vmatprep.subr.mxu0 0.0
    %1100 = vmatpush1.msra.mxu0 0.0
    %1101 = vmatprep.subr.mxu0 0.0
    %1102 = vmatpush1.msra.mxu0 0.0
    %1103 = vmatprep.subr.mxu0 0.0
    %1104 = vmatpush1.msra.mxu0 0.0
    %1105 = vmatprep.subr.mxu0 0.0
    %1106 = vmatpush1.msra.mxu0 0.0
    %1107 = vmatprep.subr.mxu0 0.0
    %1108 = vmatpush1.msra.mxu0 0.0
    %1109 = vmatprep.subr.mxu0 0.0
    %1110 = vmatpush1.msra.mxu0 0.0
    %1111 = vmatprep.subr.mxu0 0.0
    %1112 = vmatpush1.msra.mxu0 0.0
    %1113 = vmatprep.subr.mxu0 0.0
    %1114 = vmatpush1.msra.mxu0 0.0
    %1115 = vmatprep.subr.mxu0 0.0
    %1116 = vmatpush1.msra.mxu0 0.0
    %1117 = vmatprep.subr.mxu0 0.0
    %1118 = vmatpush1.msra.mxu0 0.0
    %1119 = vmatprep.subr.mxu0 0.0
    %1120 = vmatpush1.msra.mxu0 0.0
    %1121 = vmatprep.subr.mxu0 0.0
    %1122 = vmatpush1.msra.mxu0 0.0
    %1123 = vmatprep.subr.mxu0 0.0
    %1124 = vmatpush1.msra.mxu0 0.0
    %1125 = vmatprep.subr.mxu0 0.0
    %1126 = vmatpush1.msra.mxu0 0.0
    %1127 = vmatprep.subr.mxu0 0.0
    %1128 = vmatpush1.msra.mxu0 0.0
    %1129 = vmatprep.subr.mxu0 0.0
    %1130 = vmatpush1.msra.mxu0 0.0
    %1131 = vmatprep.subr.mxu0 0.0
    %1132 = vmatpush1.msra.mxu0 0.0
    %1133 = vmatprep.subr.mxu0 0.0
    %1134 = vmatpush1.msra.mxu0 0.0
    %1135 = vmatprep.subr.mxu0 0.0
    %1136 = vmatpush1.msra.mxu0 0.0
    %1137 = vmatprep.subr.mxu0 0.0
    %1138 = vmatpush1.msra.mxu0 0.0
    %1139 = vmatprep.subr.mxu0 0.0
    %1140 = vmatpush1.msra.mxu0 0.0
    %1141 = vmatprep.subr.mxu0 0.0
    %1142 = vmatpush1.msra.mxu0 0.0
    %1143 = vmatprep.subr.mxu0 0.0
    %1144 = vmatpush1.msra.mxu0 0.0
    %1145 = vmatprep.subr.mxu0 0.0
    %1146 = vmatpush1.msra.mxu0 0.0
    %1147 = vmatprep.subr.mxu0 0.0
    %1148 = vmatpush1.msra.mxu0 0.0
    %1149 = vmatprep.subr.mxu0 0.0
    %1150 = vmatpush1.msra.mxu0 0.0
    %1151 = vmatprep.mubr.f32.mxu0 0.0
    %1152 = vmatmul.mubr.f32.gmra.mrb[0].mxu0 %v1085
    %v1153 = vpop.f32.mrb[0].mxu0
    %v1154 = vadd.f32 %v1081, %v1153
    %v1155 = vpop.f32.mrb[0].mxu0
    %1156 = vdwg.mxu0
    %v1158 = vsel %vm1010, %v1008, 0
    %1160 = vmatprep.subr.mxu0 0.0
    %1161 = vmatpush1.msra.mxu0 %v59
    %1162 = vmatprep.subr.mxu0 0.0
    %1163 = vmatpush1.msra.mxu0 0.0
    %1164 = vmatprep.subr.mxu0 0.0
    %1165 = vmatpush1.msra.mxu0 0.0
    %1166 = vmatprep.subr.mxu0 0.0
    %1167 = vmatpush1.msra.mxu0 0.0
    %1168 = vmatprep.subr.mxu0 0.0
    %1169 = vmatpush1.msra.mxu0 0.0
    %1170 = vmatprep.subr.mxu0 0.0
    %1171 = vmatpush1.msra.mxu0 0.0
    %1172 = vmatprep.subr.mxu0 0.0
    %1173 = vmatpush1.msra.mxu0 0.0
    %1174 = vmatprep.subr.mxu0 0.0
    %1175 = vmatpush1.msra.mxu0 0.0
    %1176 = vmatprep.subr.mxu0 0.0
    %1177 = vmatpush1.msra.mxu0 0.0
    %1178 = vmatprep.subr.mxu0 0.0
    %1179 = vmatpush1.msra.mxu0 0.0
    %1180 = vmatprep.subr.mxu0 0.0
    %1181 = vmatpush1.msra.mxu0 0.0
    %1182 = vmatprep.subr.mxu0 0.0
    %1183 = vmatpush1.msra.mxu0 0.0
    %1184 = vmatprep.subr.mxu0 0.0
    %1185 = vmatpush1.msra.mxu0 0.0
    %1186 = vmatprep.subr.mxu0 0.0
    %1187 = vmatpush1.msra.mxu0 0.0
    %1188 = vmatprep.subr.mxu0 0.0
    %1189 = vmatpush1.msra.mxu0 0.0
    %1190 = vmatprep.subr.mxu0 0.0
    %1191 = vmatpush1.msra.mxu0 0.0
    %1192 = vmatprep.subr.mxu0 0.0
    %1193 = vmatpush1.msra.mxu0 0.0
    %1194 = vmatprep.subr.mxu0 0.0
    %1195 = vmatpush1.msra.mxu0 0.0
    %1196 = vmatprep.subr.mxu0 0.0
    %1197 = vmatpush1.msra.mxu0 0.0
    %1198 = vmatprep.subr.mxu0 0.0
    %1199 = vmatpush1.msra.mxu0 0.0
    %1200 = vmatprep.subr.mxu0 0.0
    %1201 = vmatpush1.msra.mxu0 0.0
    %1202 = vmatprep.subr.mxu0 0.0
    %1203 = vmatpush1.msra.mxu0 0.0
    %1204 = vmatprep.subr.mxu0 0.0
    %1205 = vmatpush1.msra.mxu0 0.0
    %1206 = vmatprep.subr.mxu0 0.0
    %1207 = vmatpush1.msra.mxu0 0.0
    %1208 = vmatprep.subr.mxu0 0.0
    %1209 = vmatpush1.msra.mxu0 0.0
    %1210 = vmatprep.subr.mxu0 0.0
    %1211 = vmatpush1.msra.mxu0 0.0
    %1212 = vmatprep.subr.mxu0 0.0
    %1213 = vmatpush1.msra.mxu0 0.0
    %1214 = vmatprep.subr.mxu0 0.0
    %1215 = vmatpush1.msra.mxu0 0.0
    %1216 = vmatprep.subr.mxu0 0.0
    %1217 = vmatpush1.msra.mxu0 0.0
    %1218 = vmatprep.subr.mxu0 0.0
    %1219 = vmatpush1.msra.mxu0 0.0
    %1220 = vmatprep.subr.mxu0 0.0
    %1221 = vmatpush1.msra.mxu0 0.0
    %1222 = vmatprep.subr.mxu0 0.0
    %1223 = vmatpush1.msra.mxu0 0.0
    %1224 = vmatprep.mubr.f32.mxu0 0.0
    %1225 = vmatmul.mubr.f32.gmra.mrb[0].mxu0 %v1158
    %v1226 = vpop.f32.mrb[0].mxu0
    %v1227 = vadd.f32 0.0, %v1226
    %v1228 = vpop.f32.mrb[0].mxu0
    %1229 = vdwg.mxu0
    %v1230 = vadd.f32 %v1154, %v1227
    %1232 = vset.pattern.permute.xlu0 0
    %1233 = vperm.xlu0 %1232, %v67
    %v1234 = vpop.permute.xlu0 %1233
    %v1236 = vlaneseq
    %v1237 = vshrl.u32 %v1236, 7
    %v1238 = vsub.s32 0, %v1237
    %v1239 = vrot.slane %v64, %v1238
    %v1240 = vmul.f32 %v1234, %v1239
    %v1241 = vadd.f32 %v1230, %v1240
    %v1242 = vlaneseq
    %v1243 = vshrl.u32 %v1242, 7
    %v1244 = vsub.s32 0, %v1243
    %v1245 = vrot.slane %v65, %v1244
    %v1246 = vadd.f32 %v1241, %v1245
    %v1247 = vmul.f32 %v1246, 0.5
    %v1248 = vmul.f32 %v1246, 0.70710677
    %v1249 = verf.f32.pop %v1248
    %v1250 = vadd.f32 %v1249, 1.0
    %v1251 = vmul.f32 %v1247, %v1250
    %v1252 = vlaneseq
    %v1253 = vshrl.u32 %v1252, 7
    %v1254 = vsub.s32 0, %v1253
    %v1255 = vrot.slane %v66, %v1254
    %vm1256 = vcmask 195584
    %v1258 = vsel %vm1256, %v1251, 0
    %1260 = vmatprep.subr.mxu0 0.0
    %1261 = vmatpush1.msra.mxu0 %v60
    %1262 = vmatprep.subr.mxu0 0.0
    %1263 = vmatpush1.msra.mxu0 %v61
    %1264 = vmatprep.subr.mxu0 0.0
    %1265 = vmatpush1.msra.mxu0 %v62
    %1266 = vmatprep.subr.mxu0 0.0
    %1267 = vmatpush1.msra.mxu0 0.0
    %1268 = vmatprep.subr.mxu0 0.0
    %1269 = vmatpush1.msra.mxu0 0.0
    %1270 = vmatprep.subr.mxu0 0.0
    %1271 = vmatpush1.msra.mxu0 0.0
    %1272 = vmatprep.subr.mxu0 0.0
    %1273 = vmatpush1.msra.mxu0 0.0
    %1274 = vmatprep.subr.mxu0 0.0
    %1275 = vmatpush1.msra.mxu0 0.0
    %1276 = vmatprep.subr.mxu0 0.0
    %1277 = vmatpush1.msra.mxu0 0.0
    %1278 = vmatprep.subr.mxu0 0.0
    %1279 = vmatpush1.msra.mxu0 0.0
    %1280 = vmatprep.subr.mxu0 0.0
    %1281 = vmatpush1.msra.mxu0 0.0
    %1282 = vmatprep.subr.mxu0 0.0
    %1283 = vmatpush1.msra.mxu0 0.0
    %1284 = vmatprep.subr.mxu0 0.0
    %1285 = vmatpush1.msra.mxu0 0.0
    %1286 = vmatprep.subr.mxu0 0.0
    %1287 = vmatpush1.msra.mxu0 0.0
    %1288 = vmatprep.subr.mxu0 0.0
    %1289 = vmatpush1.msra.mxu0 0.0
    %1290 = vmatprep.subr.mxu0 0.0
    %1291 = vmatpush1.msra.mxu0 0.0
    %1292 = vmatprep.subr.mxu0 0.0
    %1293 = vmatpush1.msra.mxu0 0.0
    %1294 = vmatprep.subr.mxu0 0.0
    %1295 = vmatpush1.msra.mxu0 0.0
    %1296 = vmatprep.subr.mxu0 0.0
    %1297 = vmatpush1.msra.mxu0 0.0
    %1298 = vmatprep.subr.mxu0 0.0
    %1299 = vmatpush1.msra.mxu0 0.0
    %1300 = vmatprep.subr.mxu0 0.0
    %1301 = vmatpush1.msra.mxu0 0.0
    %1302 = vmatprep.subr.mxu0 0.0
    %1303 = vmatpush1.msra.mxu0 0.0
    %1304 = vmatprep.subr.mxu0 0.0
    %1305 = vmatpush1.msra.mxu0 0.0
    %1306 = vmatprep.subr.mxu0 0.0
    %1307 = vmatpush1.msra.mxu0 0.0
    %1308 = vmatprep.subr.mxu0 0.0
    %1309 = vmatpush1.msra.mxu0 0.0
    %1310 = vmatprep.subr.mxu0 0.0
    %1311 = vmatpush1.msra.mxu0 0.0
    %1312 = vmatprep.subr.mxu0 0.0
    %1313 = vmatpush1.msra.mxu0 0.0
    %1314 = vmatprep.subr.mxu0 0.0
    %1315 = vmatpush1.msra.mxu0 0.0
    %1316 = vmatprep.subr.mxu0 0.0
    %1317 = vmatpush1.msra.mxu0 0.0
    %1318 = vmatprep.subr.mxu0 0.0
    %1319 = vmatpush1.msra.mxu0 0.0
    %1320 = vmatprep.subr.mxu0 0.0
    %1321 = vmatpush1.msra.mxu0 0.0
    %1322 = vmatprep.subr.mxu0 0.0
    %1323 = vmatpush1.msra.mxu0 0.0
    %1324 = vmatprep.mubr.f32.mxu0 0.0
    %1325 = vmatmul.mubr.f32.gmra.mrb[0].mxu0 %v1258
    %v1326 = vpop.f32.mrb[0].mxu0
    %v1327 = vadd.f32 %v1255, %v1326
    %v1328 = vpop.f32.mrb[0].mxu0
    %1329 = vdwg.mxu0
    %vm1330 = vcmask 9216
    %v1331 = vsel %vm1330, %v1327, -inf
    %1332 = vmax.xlane.f32.xlu0 %v1331
    %v1333 = vpop.xlane.xlu0 %1332
    %v1334 = vsub.f32 %v1327, %v1333
    %v1335 = vmul.f32 %v1334, 1.442695
    %v1336 = vpow.pop %v1335
    %v1337 = vsel %vm1330, %v1336, 0.0
    %1338 = vadd.xlane.f32.xlu0 %v1337
    %v1339 = vpop.xlane.xlu0 %1338
    %v1340 = vlog2.pop %v1339
    %v1341 = vmul.f32 %v1340, 0.6931472
    %v1342 = vadd.f32 %v1333, %v1341
    %v1343 = vsub.f32 %v1327, %v1342
    %1344 = vst.msk [vmem:[#allocation5] sm:$0x3] %vm1330, %v1343
    // Predicated region
    $region38: #{tpu_custom_call.1} parent=1 // pred_check
      _
    $region39: #{tpu_custom_call.1} parent=1 // pred_check_branch
      %1346 = sbr.rel (0) target = $region41
    $region40: #{tpu_custom_call.1} parent=1 // pred_region
      %s1348 = ssub.s32 32, 32
      %1349 = vsyncadd [#allocation3], %s1348
      %s1351 = sshll.u32 [#allocation5], 4
      %s1352 = int_to_ptr.vmem [resolvable:$true] %s1351
      %1354 = dma.vmem_to_hbm [thread:$0]  %s1352, 32, %s8, [#allocation3]
    $region41: #{tpu_custom_call.1} parent=1 // pred_fallthru
      _
    // Predicated region
    $region42: #{tpu_custom_call.1} parent=1 // pred_check
      _
    $region43: #{tpu_custom_call.1} parent=1 // pred_check_branch
      %1356 = sbr.rel (0) target = $region45
    $region44: #{tpu_custom_call.1} parent=1 // pred_region
      %1357 = dma.done [#allocation3], 32
    $region45: #{tpu_custom_call.1} parent=1 // pred_fallthru
      _
    %1358 = vsyncpa [#allocation3], 1
    %1359 = vsyncpa [#allocation4], 1

</llo_original>
